<compile_context>
chip_gen: v7x
topology: tpu7x:2x2x1
jax: 0.10.0
libtpu: 0.0.40
codegen_flags: <defaults>
</compile_context>

<pallas_src>
import jax
import jax.numpy as jnp
from jax import lax
from jax.experimental import pallas as pl
from jax.experimental.pallas import tpu as pltpu


def _attention_kernel(x_ref, wqkv_ref, wp_ref, bp_ref, out_ref, attn_ref,
                      acc_ref, ctx_ref):
    """One (batch, head_block) grid step.

    x_ref:    (1, L, D)            tokens for this batch element
    wqkv_ref: (HB, D, 3*g*hd)      fused q/k/v weights, resident in VMEM
                                   (softmax scale folded into the q part)
    wp_ref:   (HB, g*hd, dim_out)  output-projection weight, resident
    bp_ref:   (1, dim_out)         output-projection bias, resident
    out_ref:  (1, L, dim_out)      projected output (resident across head blocks)
    attn_ref: (1, g, L, L)         softmax attention weights for this head block
    acc_ref:  (L, dim_out) f32     VMEM accumulator for the output projection
    ctx_ref:  (L, g*hd)            VMEM staging for this head block's context
    """
    hb = pl.program_id(1)

    @pl.when(hb == 0)
    def _init():
        acc_ref[...] = jnp.zeros_like(acc_ref)

    x = x_ref[0]                              # (L, D), native (bf16/f32) dtype
    cdt = x.dtype                             # dtype fed to the MXU
    g = attn_ref.shape[1]
    ghd = ctx_ref.shape[1]
    hd = ghd // g

    # Fused q/k/v projection: one (L, D) @ (D, 3*g*hd) matmul, f32 accumulation.
    qkv = jnp.dot(x, wqkv_ref[hb], preferred_element_type=jnp.float32)

    # Per-head attention inside the head block (g is small; static unroll,
    # static lane slices only -> no in-kernel reshapes / transposes).
    for h in range(g):
        q_h = qkv[:, h * hd:(h + 1) * hd].astype(cdt)
        k_h = qkv[:, ghd + h * hd:ghd + (h + 1) * hd].astype(cdt)
        v_h = qkv[:, 2 * ghd + h * hd:2 * ghd + (h + 1) * hd].astype(cdt)

        # scores = q @ k^T by contracting the last dims (no materialized k^T).
        s = lax.dot_general(q_h, k_h, (((1,), (1,)), ((), ())),
                            preferred_element_type=jnp.float32)       # (L, L)
        s = s - jnp.max(s, axis=-1, keepdims=True)
        p = jnp.exp(s)
        probs = p / jnp.sum(p, axis=-1, keepdims=True)      # exact softmax rows

        probs_c = probs.astype(cdt)       # cast once; reused for store + matmul
        attn_ref[0, h] = probs_c.astype(attn_ref.dtype)
        ctx_ref[:, h * hd:(h + 1) * hd] = jnp.dot(
            probs_c, v_h, preferred_element_type=jnp.float32).astype(cdt)

    # Output projection for the whole head block: (L, g*hd) @ (g*hd, dim_out),
    # accumulated in f32 across the head-block ("arbitrary") grid axis.
    acc_ref[...] += jnp.dot(ctx_ref[...], wp_ref[hb],
                            preferred_element_type=jnp.float32)

    @pl.when(hb == pl.num_programs(1) - 1)
    def _finalize():
        out_ref[0] = (acc_ref[...]
                      + bp_ref[...].astype(jnp.float32)).astype(out_ref.dtype)


def _vmem_limit_bytes():
    """~3/4 of physical VMEM: ~48 MiB on v7x, ~96 MiB on v5e/v6e."""
    cap = 128 * 1024 * 1024
    try:
        info = pltpu.get_tpu_info()
        cap = int(getattr(info, "vmem_capacity_bytes", cap) or cap)
    except Exception:
        pass
    return max(16 * 1024 * 1024, min((cap * 3) // 4, 112 * 1024 * 1024))


def _choose_heads_per_block(num_heads, head_dim, L, D, dim_out, itemsize,
                            vmem_budget):
    """Largest divisor `g` of num_heads whose per-step blocks fit the VMEM budget;
    stop growing once g*hd fills the 256-wide MXU."""
    fixed = (3 * L * L * 4                                # f32 softmax temporaries
             + 2 * L * D * itemsize                       # x block (double-buffered)
             + 2 * L * dim_out * itemsize                 # out block
             + L * dim_out * 4                            # f32 accumulator
             + 2 * (3 * D * D + D * dim_out) * itemsize)  # resident weights
    g = 1
    for cand in range(1, num_heads + 1):
        if num_heads % cand:
            continue
        per_g = (2 * cand * L * L * itemsize              # attn out block (dbl-buf)
                 + 4 * L * 3 * cand * head_dim            # f32 fused qkv activation
                 + L * cand * head_dim * itemsize)        # ctx staging scratch
        if cand > 1 and fixed + per_g > (vmem_budget * 3) // 4:
            break
        g = cand
        if cand * head_dim >= 256:
            break
    return g


def attention_forward(x, w_qkv, w_proj, b_proj, num_heads):
    """x: (B, L, dim_in); w_qkv: (3*dim_in, dim_in) with output rows ordered
    [3, H, hd]; w_proj: (dim_out, dim_in); b_proj: (dim_out,).
    Returns (out (B, L, dim_out), attn (B, H, L, L))."""
    B, L, D = x.shape
    dim_out, proj_in = w_proj.shape
    assert D % num_heads == 0, "dim_in must be divisible by num_heads"
    assert proj_in == D, "proj input dim must equal dim_in"
    # Note: the PyTorch module's reshape(B, -1, dim_out) is only shape-preserving
    # when dim_out == dim_in (standard usage of this module).
    head_dim = D // num_heads
    scale = float(head_dim) ** -0.5
    itemsize = x.dtype.itemsize

    vmem_limit = _vmem_limit_bytes()
    g = _choose_heads_per_block(num_heads, head_dim, L, D, dim_out, itemsize,
                                vmem_limit)
    HB = num_heads // g
    ghd = g * head_dim

    # One-time wrapper-side weight re-layout:
    #   * q/k/v fused per head block, already transposed to (in, out),
    #   * softmax scale folded into the q part,
    #   * per-head-block slice of the projection weight.
    w_r = w_qkv.reshape(3, num_heads, head_dim, D)
    w_r = jnp.concatenate([w_r[0:1] * scale, w_r[1:]], axis=0)
    w_r = w_r.reshape(3, HB, g, head_dim, D)
    wqkv = jnp.transpose(w_r, (1, 4, 0, 2, 3)).reshape(HB, D, 3 * ghd)
    wp = jnp.transpose(w_proj.reshape(dim_out, HB, ghd), (1, 2, 0))  # (HB, ghd, dim_out)
    bp = b_proj.reshape(1, dim_out)

    flops = (2 * B * L * D * 3 * D                       # fused qkv projection
             + 4 * B * num_heads * L * L * head_dim      # scores + probs @ v
             + 2 * B * L * D * dim_out)                  # output projection
    bytes_accessed = ((x.size + B * L * dim_out + B * num_heads * L * L) * itemsize
                      + (w_qkv.size + w_proj.size + b_proj.size)
                      * w_qkv.dtype.itemsize)            # weights fetched once
    cost = pl.CostEstimate(flops=int(flops),
                           transcendentals=int(B * num_heads * L * L),
                           bytes_accessed=int(bytes_accessed))

    out, attn = pl.pallas_call(
        _attention_kernel,
        out_shape=(
            jax.ShapeDtypeStruct((B, L, dim_out), x.dtype),
            jax.ShapeDtypeStruct((B, num_heads, L, L), x.dtype),
        ),
        grid_spec=pltpu.PrefetchScalarGridSpec(
            num_scalar_prefetch=0,
            grid=(B, HB),
            in_specs=[
                pl.BlockSpec((1, L, D), lambda b, hb: (b, 0, 0)),
                # Weights / bias fully resident: fetched from HBM exactly once.
                pl.BlockSpec((HB, D, 3 * ghd), lambda b, hb: (0, 0, 0)),
                pl.BlockSpec((HB, ghd, dim_out), lambda b, hb: (0, 0, 0)),
                pl.BlockSpec((1, dim_out), lambda b, hb: (0, 0)),
            ],
            out_specs=[
                pl.BlockSpec((1, L, dim_out), lambda b, hb: (b, 0, 0)),
                pl.BlockSpec((1, g, L, L), lambda b, hb: (b, hb, 0, 0)),
            ],
            scratch_shapes=[
                pltpu.VMEM((L, dim_out), jnp.float32),   # output-proj accumulator
                pltpu.VMEM((L, ghd), x.dtype),           # head-block context staging
            ],
        ),
        compiler_params=pltpu.CompilerParams(
            dimension_semantics=("parallel", "arbitrary"),
            vmem_limit_bytes=vmem_limit,
        ),
        cost_estimate=cost,
    )(x, wqkv, wp, bp)
    return out, attn


def attention_reference(x, w_qkv, w_proj, b_proj, num_heads):
    """Pure-JAX mirror of the PyTorch forward for verification."""
    B, L, D = x.shape
    head_dim = D // num_heads
    dim_out = w_proj.shape[0]
    scale = float(head_dim) ** -0.5
    qkv = x @ w_qkv.T                                        # (B, L, 3D)
    qkv = qkv.reshape(B, L, 3, num_heads, head_dim).transpose(2, 0, 3, 1, 4)
    q, k, v = qkv[0], qkv[1], qkv[2]                         # (B, H, L, hd)
    attn = jnp.einsum('bhld,bhmd->bhlm', q * scale, k)
    attn = jax.nn.softmax(attn, axis=-1)
    ctx = jnp.einsum('bhlm,bhmd->bhld', attn, v)
    ctx = ctx.transpose(0, 2, 1, 3).reshape(B, -1, dim_out)  # requires dim_out == dim_in
    out = ctx @ w_proj.T + b_proj
    return out, attn


if __name__ == "__main__":
    # Small shapes consistent with the module (dim_out == dim_in so the
    # PyTorch reshape(B, -1, dim_out) is well-defined).
    B, L, dim_in, num_heads = 2, 8, 32, 4
    dim_out = dim_in

    key = jax.random.PRNGKey(0)
    kx, kqkv, kpw, kpb = jax.random.split(key, 4)
    x = jax.random.normal(kx, (B, L, dim_in), dtype=jnp.float32)
    w_qkv = jax.random.normal(kqkv, (3 * dim_in, dim_in), dtype=jnp.float32) * 0.1
    w_proj = jax.random.normal(kpw, (dim_out, dim_in), dtype=jnp.float32) * 0.1
    b_proj = jax.random.normal(kpb, (dim_out,), dtype=jnp.float32) * 0.1

    out, attn = attention_forward(x, w_qkv, w_proj, b_proj, num_heads)
    out, attn = jax.block_until_ready((out, attn))

    out_ref, attn_ref = attention_reference(x, w_qkv, w_proj, b_proj, num_heads)
    assert jnp.allclose(out, out_ref, atol=2e-3, rtol=2e-3), "output mismatch"
    assert jnp.allclose(attn, attn_ref, atol=2e-3, rtol=2e-3), "attn mismatch"

    print("KERNEL_OK")
</pallas_src>

<mosaic_0001>
module attributes {stable_mosaic.version = 11 : i64} {
  func.func @_attention_kernel(%arg0: i32, %arg1: i32, %arg2: memref<1x8x32xf32, #tpu.memory_space<vmem>>, %arg3: memref<1x32x96xf32, #tpu.memory_space<vmem>>, %arg4: memref<1x32x32xf32, #tpu.memory_space<vmem>>, %arg5: memref<1x32xf32, #tpu.memory_space<vmem>>, %arg6: memref<1x8x32xf32, #tpu.memory_space<vmem>>, %arg7: memref<1x4x8x8xf32, #tpu.memory_space<vmem>>, %arg8: memref<8x32xf32, #tpu.memory_space<vmem>>, %arg9: memref<8x32xf32, #tpu.memory_space<vmem>>) attributes {dimension_semantics = [#tpu.dimension_semantics<parallel>, #tpu.dimension_semantics<arbitrary>], iteration_bounds = array<i64: 2, 1>, scalar_prefetch = 0 : i64, scratch_operands = 2 : i64, tpu.core_type = #tpu.core_type<tc>, window_params = [{transform_indices = @transform_0, window_bounds = array<i64: 1, 8, 32>}, {pipeline_mode = #tpu.pipeline_mode<synchronous>, transform_indices = @transform_1, window_bounds = array<i64: 1, 32, 96>}, {pipeline_mode = #tpu.pipeline_mode<synchronous>, transform_indices = @transform_2, window_bounds = array<i64: 1, 32, 32>}, {pipeline_mode = #tpu.pipeline_mode<synchronous>, transform_indices = @transform_3, window_bounds = array<i64: 1, 32>}, {transform_indices = @transform_4, window_bounds = array<i64: 1, 8, 32>}, {transform_indices = @transform_5, window_bounds = array<i64: 1, 4, 8, 8>}]} {
    %c0_i32 = arith.constant 0 : i32
    %0 = arith.cmpi eq, %arg1, %c0_i32 : i32
    %1 = arith.extui %0 : i1 to i32
    %c0_i32_0 = arith.constant 0 : i32
    %2 = arith.cmpi ne, %1, %c0_i32_0 : i32
    scf.if %2 {
      %cst_50 = arith.constant 0.000000e+00 : f32
      %92 = vector.broadcast %cst_50 : f32 to vector<8x32xf32>
      %c0_51 = arith.constant 0 : index
      %c0_52 = arith.constant 0 : index
      %93 = vector.load %arg8[%c0_51, %c0_52] : memref<8x32xf32, #tpu.memory_space<vmem>>, vector<8x32xf32>
      tpu.vector_store %arg8[%c0_51, %c0_52], %92 {strides = array<i32>} : memref<8x32xf32, #tpu.memory_space<vmem>>, vector<8x32xf32>,
    } else {
    }
    %c0 = arith.constant 0 : index
    %c0_1 = arith.constant 0 : index
    %c0_2 = arith.constant 0 : index
    %3 = vector.load %arg2[%c0, %c0_1, %c0_2] : memref<1x8x32xf32, #tpu.memory_space<vmem>>, vector<1x8x32xf32>
    %4 = vector.shape_cast %3 : vector<1x8x32xf32> to vector<8x32xf32>
    %5 = arith.index_cast %arg1 : i32 to index
    %c0_3 = arith.constant 0 : index
    %c0_4 = arith.constant 0 : index
    %6 = vector.load %arg3[%5, %c0_3, %c0_4] : memref<1x32x96xf32, #tpu.memory_space<vmem>>, vector<1x32x96xf32>
    %7 = vector.shape_cast %6 : vector<1x32x96xf32> to vector<32x96xf32>
    %cst = arith.constant dense<0.000000e+00> : vector<8x96xf32>
    %8 = tpu.matmul %4, %7, %cst {dimension_numbers = #tpu.dot_dimension_numbers<[1], [0], [0], [1], [0, 0, 1, 1], [], []>} : vector<8x32xf32>, vector<32x96xf32>, vector<8x96xf32> -> vector<8x96xf32>
    %9 = vector.extract_strided_slice %8 {offsets = [0, 0], sizes = [8, 8], strides = [1, 1]} : vector<8x96xf32> to vector<8x8xf32>
    %10 = vector.extract_strided_slice %8 {offsets = [0, 32], sizes = [8, 8], strides = [1, 1]} : vector<8x96xf32> to vector<8x8xf32>
    %11 = vector.extract_strided_slice %8 {offsets = [0, 64], sizes = [8, 8], strides = [1, 1]} : vector<8x96xf32> to vector<8x8xf32>
    %cst_5 = arith.constant dense<0.000000e+00> : vector<8x8xf32>
    %12 = tpu.matmul %9, %10, %cst_5 {dimension_numbers = #tpu.dot_dimension_numbers<[1], [1], [0], [0], [0, 0, 1, 0], [], []>} : vector<8x8xf32>, vector<8x8xf32>, vector<8x8xf32> -> vector<8x8xf32>
    %cst_6 = arith.constant dense<0xFF800000> : vector<8xf32>
    %13 = vector.multi_reduction <maximumf>, %12, %cst_6 [1] : vector<8x8xf32> to vector<8xf32>
    %14 = vector.shape_cast %13 : vector<8xf32> to vector<8x1xf32>
    %15 = vector.broadcast %14 : vector<8x1xf32> to vector<8x8xf32>
    %16 = arith.subf %12, %15 : vector<8x8xf32>
    %17 = math.exp %16 : vector<8x8xf32>
    %cst_7 = arith.constant dense<0.000000e+00> : vector<8xf32>
    %18 = vector.multi_reduction <add>, %17, %cst_7 [1] : vector<8x8xf32> to vector<8xf32>
    %19 = vector.shape_cast %18 : vector<8xf32> to vector<8x1xf32>
    %20 = vector.broadcast %19 : vector<8x1xf32> to vector<8x8xf32>
    %21 = arith.divf %17, %20 : vector<8x8xf32>
    %c0_8 = arith.constant 0 : index
    %c0_9 = arith.constant 0 : index
    %c0_10 = arith.constant 0 : index
    %c0_11 = arith.constant 0 : index
    %22 = vector.load %arg7[%c0_8, %c0_9, %c0_10, %c0_11] : memref<1x4x8x8xf32, #tpu.memory_space<vmem>>, vector<1x1x8x8xf32>
    %23 = vector.shape_cast %22 : vector<1x1x8x8xf32> to vector<8x8xf32>
    %24 = vector.shape_cast %21 : vector<8x8xf32> to vector<1x1x8x8xf32>
    tpu.vector_store %arg7[%c0_8, %c0_9, %c0_10, %c0_11], %24 {strides = array<i32>} : memref<1x4x8x8xf32, #tpu.memory_space<vmem>>, vector<1x1x8x8xf32>,
    %cst_12 = arith.constant dense<0.000000e+00> : vector<8x8xf32>
    %25 = tpu.matmul %21, %11, %cst_12 {dimension_numbers = #tpu.dot_dimension_numbers<[1], [0], [0], [1], [0, 0, 1, 1], [], []>} : vector<8x8xf32>, vector<8x8xf32>, vector<8x8xf32> -> vector<8x8xf32>
    %c0_13 = arith.constant 0 : index
    %c0_14 = arith.constant 0 : index
    %26 = vector.load %arg9[%c0_13, %c0_14] : memref<8x32xf32, #tpu.memory_space<vmem>>, vector<8x8xf32>
    tpu.vector_store %arg9[%c0_13, %c0_14], %25 {strides = array<i32>} : memref<8x32xf32, #tpu.memory_space<vmem>>, vector<8x8xf32>,
    %27 = vector.extract_strided_slice %8 {offsets = [0, 8], sizes = [8, 8], strides = [1, 1]} : vector<8x96xf32> to vector<8x8xf32>
    %28 = vector.extract_strided_slice %8 {offsets = [0, 40], sizes = [8, 8], strides = [1, 1]} : vector<8x96xf32> to vector<8x8xf32>
    %29 = vector.extract_strided_slice %8 {offsets = [0, 72], sizes = [8, 8], strides = [1, 1]} : vector<8x96xf32> to vector<8x8xf32>
    %cst_15 = arith.constant dense<0.000000e+00> : vector<8x8xf32>
    %30 = tpu.matmul %27, %28, %cst_15 {dimension_numbers = #tpu.dot_dimension_numbers<[1], [1], [0], [0], [0, 0, 1, 0], [], []>} : vector<8x8xf32>, vector<8x8xf32>, vector<8x8xf32> -> vector<8x8xf32>
    %cst_16 = arith.constant dense<0xFF800000> : vector<8xf32>
    %31 = vector.multi_reduction <maximumf>, %30, %cst_16 [1] : vector<8x8xf32> to vector<8xf32>
    %32 = vector.shape_cast %31 : vector<8xf32> to vector<8x1xf32>
    %33 = vector.broadcast %32 : vector<8x1xf32> to vector<8x8xf32>
    %34 = arith.subf %30, %33 : vector<8x8xf32>
    %35 = math.exp %34 : vector<8x8xf32>
    %cst_17 = arith.constant dense<0.000000e+00> : vector<8xf32>
    %36 = vector.multi_reduction <add>, %35, %cst_17 [1] : vector<8x8xf32> to vector<8xf32>
    %37 = vector.shape_cast %36 : vector<8xf32> to vector<8x1xf32>
    %38 = vector.broadcast %37 : vector<8x1xf32> to vector<8x8xf32>
    %39 = arith.divf %35, %38 : vector<8x8xf32>
    %c0_18 = arith.constant 0 : index
    %c1 = arith.constant 1 : index
    %c0_19 = arith.constant 0 : index
    %c0_20 = arith.constant 0 : index
    %40 = vector.load %arg7[%c0_18, %c1, %c0_19, %c0_20] : memref<1x4x8x8xf32, #tpu.memory_space<vmem>>, vector<1x1x8x8xf32>
    %41 = vector.shape_cast %40 : vector<1x1x8x8xf32> to vector<8x8xf32>
    %42 = vector.shape_cast %39 : vector<8x8xf32> to vector<1x1x8x8xf32>
    tpu.vector_store %arg7[%c0_18, %c1, %c0_19, %c0_20], %42 {strides = array<i32>} : memref<1x4x8x8xf32, #tpu.memory_space<vmem>>, vector<1x1x8x8xf32>,
    %cst_21 = arith.constant dense<0.000000e+00> : vector<8x8xf32>
    %43 = tpu.matmul %39, %29, %cst_21 {dimension_numbers = #tpu.dot_dimension_numbers<[1], [0], [0], [1], [0, 0, 1, 1], [], []>} : vector<8x8xf32>, vector<8x8xf32>, vector<8x8xf32> -> vector<8x8xf32>
    %c0_22 = arith.constant 0 : index
    %c8 = arith.constant 8 : index
    %44 = vector.load %arg9[%c0_22, %c8] : memref<8x32xf32, #tpu.memory_space<vmem>>, vector<8x8xf32>
    tpu.vector_store %arg9[%c0_22, %c8], %43 {strides = array<i32>} : memref<8x32xf32, #tpu.memory_space<vmem>>, vector<8x8xf32>,
    %45 = vector.extract_strided_slice %8 {offsets = [0, 16], sizes = [8, 8], strides = [1, 1]} : vector<8x96xf32> to vector<8x8xf32>
    %46 = vector.extract_strided_slice %8 {offsets = [0, 48], sizes = [8, 8], strides = [1, 1]} : vector<8x96xf32> to vector<8x8xf32>
    %47 = vector.extract_strided_slice %8 {offsets = [0, 80], sizes = [8, 8], strides = [1, 1]} : vector<8x96xf32> to vector<8x8xf32>
    %cst_23 = arith.constant dense<0.000000e+00> : vector<8x8xf32>
    %48 = tpu.matmul %45, %46, %cst_23 {dimension_numbers = #tpu.dot_dimension_numbers<[1], [1], [0], [0], [0, 0, 1, 0], [], []>} : vector<8x8xf32>, vector<8x8xf32>, vector<8x8xf32> -> vector<8x8xf32>
    %cst_24 = arith.constant dense<0xFF800000> : vector<8xf32>
    %49 = vector.multi_reduction <maximumf>, %48, %cst_24 [1] : vector<8x8xf32> to vector<8xf32>
    %50 = vector.shape_cast %49 : vector<8xf32> to vector<8x1xf32>
    %51 = vector.broadcast %50 : vector<8x1xf32> to vector<8x8xf32>
    %52 = arith.subf %48, %51 : vector<8x8xf32>
    %53 = math.exp %52 : vector<8x8xf32>
    %cst_25 = arith.constant dense<0.000000e+00> : vector<8xf32>
    %54 = vector.multi_reduction <add>, %53, %cst_25 [1] : vector<8x8xf32> to vector<8xf32>
    %55 = vector.shape_cast %54 : vector<8xf32> to vector<8x1xf32>
    %56 = vector.broadcast %55 : vector<8x1xf32> to vector<8x8xf32>
    %57 = arith.divf %53, %56 : vector<8x8xf32>
    %c0_26 = arith.constant 0 : index
    %c2 = arith.constant 2 : index
    %c0_27 = arith.constant 0 : index
    %c0_28 = arith.constant 0 : index
    %58 = vector.load %arg7[%c0_26, %c2, %c0_27, %c0_28] : memref<1x4x8x8xf32, #tpu.memory_space<vmem>>, vector<1x1x8x8xf32>
    %59 = vector.shape_cast %58 : vector<1x1x8x8xf32> to vector<8x8xf32>
    %60 = vector.shape_cast %57 : vector<8x8xf32> to vector<1x1x8x8xf32>
    tpu.vector_store %arg7[%c0_26, %c2, %c0_27, %c0_28], %60 {strides = array<i32>} : memref<1x4x8x8xf32, #tpu.memory_space<vmem>>, vector<1x1x8x8xf32>,
    %cst_29 = arith.constant dense<0.000000e+00> : vector<8x8xf32>
    %61 = tpu.matmul %57, %47, %cst_29 {dimension_numbers = #tpu.dot_dimension_numbers<[1], [0], [0], [1], [0, 0, 1, 1], [], []>} : vector<8x8xf32>, vector<8x8xf32>, vector<8x8xf32> -> vector<8x8xf32>
    %c0_30 = arith.constant 0 : index
    %c16 = arith.constant 16 : index
    %62 = vector.load %arg9[%c0_30, %c16] : memref<8x32xf32, #tpu.memory_space<vmem>>, vector<8x8xf32>
    tpu.vector_store %arg9[%c0_30, %c16], %61 {strides = array<i32>} : memref<8x32xf32, #tpu.memory_space<vmem>>, vector<8x8xf32>,
    %63 = vector.extract_strided_slice %8 {offsets = [0, 24], sizes = [8, 8], strides = [1, 1]} : vector<8x96xf32> to vector<8x8xf32>
    %64 = vector.extract_strided_slice %8 {offsets = [0, 56], sizes = [8, 8], strides = [1, 1]} : vector<8x96xf32> to vector<8x8xf32>
    %65 = vector.extract_strided_slice %8 {offsets = [0, 88], sizes = [8, 8], strides = [1, 1]} : vector<8x96xf32> to vector<8x8xf32>
    %cst_31 = arith.constant dense<0.000000e+00> : vector<8x8xf32>
    %66 = tpu.matmul %63, %64, %cst_31 {dimension_numbers = #tpu.dot_dimension_numbers<[1], [1], [0], [0], [0, 0, 1, 0], [], []>} : vector<8x8xf32>, vector<8x8xf32>, vector<8x8xf32> -> vector<8x8xf32>
    %cst_32 = arith.constant dense<0xFF800000> : vector<8xf32>
    %67 = vector.multi_reduction <maximumf>, %66, %cst_32 [1] : vector<8x8xf32> to vector<8xf32>
    %68 = vector.shape_cast %67 : vector<8xf32> to vector<8x1xf32>
    %69 = vector.broadcast %68 : vector<8x1xf32> to vector<8x8xf32>
    %70 = arith.subf %66, %69 : vector<8x8xf32>
    %71 = math.exp %70 : vector<8x8xf32>
    %cst_33 = arith.constant dense<0.000000e+00> : vector<8xf32>
    %72 = vector.multi_reduction <add>, %71, %cst_33 [1] : vector<8x8xf32> to vector<8xf32>
    %73 = vector.shape_cast %72 : vector<8xf32> to vector<8x1xf32>
    %74 = vector.broadcast %73 : vector<8x1xf32> to vector<8x8xf32>
    %75 = arith.divf %71, %74 : vector<8x8xf32>
    %c0_34 = arith.constant 0 : index
    %c3 = arith.constant 3 : index
    %c0_35 = arith.constant 0 : index
    %c0_36 = arith.constant 0 : index
    %76 = vector.load %arg7[%c0_34, %c3, %c0_35, %c0_36] : memref<1x4x8x8xf32, #tpu.memory_space<vmem>>, vector<1x1x8x8xf32>
    %77 = vector.shape_cast %76 : vector<1x1x8x8xf32> to vector<8x8xf32>
    %78 = vector.shape_cast %75 : vector<8x8xf32> to vector<1x1x8x8xf32>
    tpu.vector_store %arg7[%c0_34, %c3, %c0_35, %c0_36], %78 {strides = array<i32>} : memref<1x4x8x8xf32, #tpu.memory_space<vmem>>, vector<1x1x8x8xf32>,
    %cst_37 = arith.constant dense<0.000000e+00> : vector<8x8xf32>
    %79 = tpu.matmul %75, %65, %cst_37 {dimension_numbers = #tpu.dot_dimension_numbers<[1], [0], [0], [1], [0, 0, 1, 1], [], []>} : vector<8x8xf32>, vector<8x8xf32>, vector<8x8xf32> -> vector<8x8xf32>
    %c0_38 = arith.constant 0 : index
    %c24 = arith.constant 24 : index
    %80 = vector.load %arg9[%c0_38, %c24] : memref<8x32xf32, #tpu.memory_space<vmem>>, vector<8x8xf32>
    tpu.vector_store %arg9[%c0_38, %c24], %79 {strides = array<i32>} : memref<8x32xf32, #tpu.memory_space<vmem>>, vector<8x8xf32>,
    %c0_39 = arith.constant 0 : index
    %c0_40 = arith.constant 0 : index
    %81 = vector.load %arg8[%c0_39, %c0_40] : memref<8x32xf32, #tpu.memory_space<vmem>>, vector<8x32xf32>
    %c0_41 = arith.constant 0 : index
    %c0_42 = arith.constant 0 : index
    %82 = vector.load %arg9[%c0_41, %c0_42] : memref<8x32xf32, #tpu.memory_space<vmem>>, vector<8x32xf32>
    %83 = arith.index_cast %arg1 : i32 to index
    %c0_43 = arith.constant 0 : index
    %c0_44 = arith.constant 0 : index
    %84 = vector.load %arg4[%83, %c0_43, %c0_44] : memref<1x32x32xf32, #tpu.memory_space<vmem>>, vector<1x32x32xf32>
    %85 = vector.shape_cast %84 : vector<1x32x32xf32> to vector<32x32xf32>
    %cst_45 = arith.constant dense<0.000000e+00> : vector<8x32xf32>
    %86 = tpu.matmul %82, %85, %cst_45 {dimension_numbers = #tpu.dot_dimension_numbers<[1], [0], [0], [1], [0, 0, 1, 1], [], []>} : vector<8x32xf32>, vector<32x32xf32>, vector<8x32xf32> -> vector<8x32xf32>
    %87 = arith.addf %81, %86 : vector<8x32xf32>
    %c0_46 = arith.constant 0 : index
    %c0_47 = arith.constant 0 : index
    %88 = vector.load %arg8[%c0_46, %c0_47] : memref<8x32xf32, #tpu.memory_space<vmem>>, vector<8x32xf32>
    tpu.vector_store %arg8[%c0_46, %c0_47], %87 {strides = array<i32>} : memref<8x32xf32, #tpu.memory_space<vmem>>, vector<8x32xf32>,
    %c0_i32_48 = arith.constant 0 : i32
    %89 = arith.cmpi eq, %arg1, %c0_i32_48 : i32
    %90 = arith.extui %89 : i1 to i32
    %c0_i32_49 = arith.constant 0 : i32
    %91 = arith.cmpi ne, %90, %c0_i32_49 : i32
    scf.if %91 {
      %c0_50 = arith.constant 0 : index
      %c0_51 = arith.constant 0 : index
      %92 = vector.load %arg8[%c0_50, %c0_51] : memref<8x32xf32, #tpu.memory_space<vmem>>, vector<8x32xf32>
      %c0_52 = arith.constant 0 : index
      %c0_53 = arith.constant 0 : index
      %93 = vector.load %arg5[%c0_52, %c0_53] : memref<1x32xf32, #tpu.memory_space<vmem>>, vector<1x32xf32>
      %94 = vector.broadcast %93 : vector<1x32xf32> to vector<8x32xf32>
      %95 = arith.addf %92, %94 : vector<8x32xf32>
      %c0_54 = arith.constant 0 : index
      %c0_55 = arith.constant 0 : index
      %c0_56 = arith.constant 0 : index
      %96 = vector.load %arg6[%c0_54, %c0_55, %c0_56] : memref<1x8x32xf32, #tpu.memory_space<vmem>>, vector<1x8x32xf32>
      %97 = vector.shape_cast %96 : vector<1x8x32xf32> to vector<8x32xf32>
      %98 = vector.shape_cast %95 : vector<8x32xf32> to vector<1x8x32xf32>
      tpu.vector_store %arg6[%c0_54, %c0_55, %c0_56], %98 {strides = array<i32>} : memref<1x8x32xf32, #tpu.memory_space<vmem>>, vector<1x8x32xf32>,
    } else {
    }
    return
  }
  func.func @transform_0(%arg0: i32, %arg1: i32) -> (i32, i32, i32) {
    %c0_i32 = arith.constant 0 : i32
    %c0_i32_0 = arith.constant 0 : i32
    %c0_i32_1 = arith.constant 0 : i32
    return %arg0, %c0_i32, %c0_i32_0 : i32, i32, i32
  }
  func.func @transform_1(%arg0: i32, %arg1: i32) -> (i32, i32, i32) {
    %c0_i32 = arith.constant 0 : i32
    %c0_i32_0 = arith.constant 0 : i32
    %c0_i32_1 = arith.constant 0 : i32
    %c0_i32_2 = arith.constant 0 : i32
    return %c0_i32, %c0_i32_0, %c0_i32_1 : i32, i32, i32
  }
  func.func @transform_2(%arg0: i32, %arg1: i32) -> (i32, i32, i32) {
    %c0_i32 = arith.constant 0 : i32
    %c0_i32_0 = arith.constant 0 : i32
    %c0_i32_1 = arith.constant 0 : i32
    %c0_i32_2 = arith.constant 0 : i32
    return %c0_i32, %c0_i32_0, %c0_i32_1 : i32, i32, i32
  }
  func.func @transform_3(%arg0: i32, %arg1: i32) -> (i32, i32) {
    %c0_i32 = arith.constant 0 : i32
    %c0_i32_0 = arith.constant 0 : i32
    %c0_i32_1 = arith.constant 0 : i32
    return %c0_i32, %c0_i32_0 : i32, i32
  }
  func.func @transform_4(%arg0: i32, %arg1: i32) -> (i32, i32, i32) {
    %c0_i32 = arith.constant 0 : i32
    %c0_i32_0 = arith.constant 0 : i32
    %c0_i32_1 = arith.constant 0 : i32
    return %arg0, %c0_i32, %c0_i32_0 : i32, i32, i32
  }
  func.func @transform_5(%arg0: i32, %arg1: i32) -> (i32, i32, i32, i32) {
    %c0_i32 = arith.constant 0 : i32
    %c0_i32_0 = arith.constant 0 : i32
    %c0_i32_1 = arith.constant 0 : i32
    return %arg0, %arg1, %c0_i32, %c0_i32_0 : i32, i32, i32, i32
  }
}

</mosaic_0001>

<llo_original>
// kernel: tpu_custom_call.1
$region0: #{tpu_custom_call.1}
  #allocation0 [shape = 'u32[]', space=smem, size = 0x4, offset = 0x4, fixed_abs, tag = 'smem constant byte address 0x4 - core index']
  #allocation1 [shape = 'u32[144,128]{1,0:T(1,128)}', space=vmem, size = 0x12000, scoped, tag = 'internal scratch']
  #allocation2 [shape = 'f32[8,32]{1,0:T(8,128)}', space=vmem, size = 0x1000, scoped, tag = 'scratch operand']
  #allocation3 [shape = 'f32[8,32]{1,0:T(8,128)}', space=vmem, size = 0x1000, scoped, tag = 'scratch operand']
  %s0 = inlined_call_operand.hbm [shape: f32[2,8,32], index: 0, kind: input, shape index: {}]
  %s1 = inlined_call_operand.hbm [shape: f32[1,32,96], index: 1, kind: input, shape index: {}]
  %s2 = inlined_call_operand.hbm [shape: f32[1,32,32], index: 2, kind: input, shape index: {}]
  %s3 = inlined_call_operand.hbm [shape: f32[1,32], index: 3, kind: input, shape index: {}]
  %s4 = inlined_call_operand.hbm [shape: f32[2,8,32], index: 4, kind: output, shape index: {0}]
  %s5 = inlined_call_operand.hbm [shape: f32[2,4,8,8], index: 5, kind: output, shape index: {1}]
  %6 = xla_tuple %s4, %s5
  %s7 = sld [smem:[#allocation0]]
  $region81: #{tpu_custom_call.1} parent=0
    _
  %s9 = ssub.s32 1, %s7
  %s10 = scalar_select 0, %s9, %s7
  $region1: #{tpu_custom_call.1} parent=0
    #allocation4 [shape = 'u8[8192]{0}', space=vmem, size = 0x2000, scoped, tag = 'input window, operand 0']
    #allocation5 [shape = 's32[2]{0}', space=sflag, size = 0x8, scoped, tag = 'scoped memory for tpu_custom_call.1']
    #allocation6 [shape = 's32[2]{0}', space=sflag, size = 0x8, scoped, tag = 'scoped memory for tpu_custom_call.1']
    #allocation7 [shape = 'u8[16384]{0}', space=vmem, size = 0x4000, scoped, tag = 'input window, operand 1, single buffered']
    #allocation8 [shape = 's32[1]{0}', space=sflag, size = 0x4, scoped, tag = 'scoped memory for tpu_custom_call.1']
    #allocation9 [shape = 'u8[16384]{0}', space=vmem, size = 0x4000, scoped, tag = 'input window, operand 2, single buffered']
    #allocation10 [shape = 'u8[512]{0}', space=vmem, size = 0x400, scoped, tag = 'input window, operand 3, single buffered']
    #allocation11 [shape = 's32[1]{0}', space=sflag, size = 0x4, scoped, tag = 'scoped memory for tpu_custom_call.1']
    #allocation12 [shape = 'u8[8192]{0}', space=vmem, size = 0x2000, scoped, tag = 'output window, operand 0']
    #allocation13 [shape = 'u8[32768]{0}', space=vmem, size = 0x8000, scoped, tag = 'output window, operand 1']
    #allocation14 [shape = 's32[2]{0}', space=sflag, size = 0x8, scoped, tag = 'scoped memory for tpu_custom_call.1']
    %11 = vsyncpa [#allocation5], 0
    %s12 = scalar_lea.sflag [#allocation5], 1
    %13 = vsyncpa %s12, 0
    %14 = vsyncpa [#allocation8], 0
    %15 = vsyncpa [#allocation11], 0
    %16 = vsyncpa [#allocation6], 0
    %s17 = scalar_lea.sflag [#allocation6], 1
    %18 = vsyncpa %s17, 0
    %19 = vsyncpa [#allocation14], 0
    %s20 = scalar_lea.sflag [#allocation14], 1
    %21 = vsyncpa %s20, 0
    loop: start=0, step=1, limit=4
    $region2: #{tpu_custom_call.1} parent=1 // loop_pre_header
      _
    $region3: #{tpu_custom_call.1} parent=1 // loop_header
      %s23 = sphi 0, %s27
      %p24 = scmp.ge.s32.totalorder %s23, 4
      %s30 = sphi 0, %s42
      %s31 = sphi 0, %s38
      %s32 = sphi 0, %s30
      %s33 = sphi 0, %s31
      %s34 = sphi 0, %s32
      %s35 = sphi 0, %s33
      %s45 = sphi 0, %s47
      %s48 = sphi 0, %s45
      %s49 = sphi 0, %s48
      %s65 = sphi 0, %s49
      %s69 = sphi 0, %s69
      %s71 = sphi 0, %s69
      %s72 = sphi 0, %s71
      %s86 = sphi 0, %s72
      %s90 = sphi 0, %s90
      %s92 = sphi 0, %s90
      %s93 = sphi 0, %s92
      %s107 = sphi 0, %s93
      %s111 = sphi 0, %s111
      %s113 = sphi 0, %s111
      %s114 = sphi 0, %s113
      %s128 = sphi 0, %s114
      %s134 = sphi 0, %s136
      %s137 = sphi 0, %s134
      %s138 = sphi 0, %s137
      %s154 = sphi 0, %s138
      %s162 = sphi 0, %s164
      %s165 = sphi 0, %s162
      %s166 = sphi 0, %s165
      %s182 = sphi 0, %s166
    $region4: #{tpu_custom_call.1} parent=1 // loop_header_branch
      %26 = sbr.rel (%p24) target = $region8
    $region5: #{tpu_custom_call.1} parent=1 // loop_body
      %s28 = ssub.s32 %s23, 1
      %s29 = ssub.s32 %s23, 2
      %s36 = sadd.s32 1, %s31
      %p37 = scmp.ge.s32.totalorder %s36, 1
      %s38 = scalar_select %p37, 0, %s36
      %s39 = sadd.s32 1, %s30
      %s40 = scalar_select %p37, %s39, %s30
      %p41 = scmp.ge.s32.totalorder %s40, 2
      %s42 = scalar_select %p41, 0, %s40
      %s43 = ssub.s32 %s30, %s42
      %p44 = scmp.eq.s32.totalorder %s43, 0
      %s46 = sadd.s32 %s45, 1
      %s47 = scalar_select %p44, %s45, %s46
      %p50 = pneg %p44
      %p51 = scmp.eq.s32.totalorder %s23, 1
      %p52 = por %p50, %p51
      %p53 = scmp.ne.s32.totalorder %s45, %s48
      %p54 = scmp.eq.s32.totalorder %s23, 0
      %p55 = por %p53, %p54
      %p56 = scmp.ne.s32.totalorder %s45, %s48
      %p57 = scmp.eq.s32.totalorder %s28, 1
      %p58 = por %p56, %p57
      %p59 = scmp.ne.s32.totalorder %s48, %s49
      %p60 = scmp.eq.s32.totalorder %s28, 0
      %p61 = por %p59, %p60
      %p62 = scmp.ne.s32.totalorder %s48, %s49
      %p63 = scmp.eq.s32.totalorder %s29, 1
      %p64 = por %p62, %p63
      %p66 = scmp.ne.s32.totalorder %s49, %s65
      %p67 = scmp.eq.s32.totalorder %s29, 0
      %p68 = por %p66, %p67
      %s70 = sadd.s32 %s69, 1
      %p73 = scmp.eq.s32.totalorder %s23, 1
      %p74 = scmp.ne.s32.totalorder %s69, %s71
      %p75 = scmp.eq.s32.totalorder %s23, 0
      %p76 = por %p74, %p75
      %p77 = scmp.ne.s32.totalorder %s69, %s71
      %p78 = scmp.eq.s32.totalorder %s28, 1
      %p79 = por %p77, %p78
      %p80 = scmp.ne.s32.totalorder %s71, %s72
      %p81 = scmp.eq.s32.totalorder %s28, 0
      %p82 = por %p80, %p81
      %p83 = scmp.ne.s32.totalorder %s71, %s72
      %p84 = scmp.eq.s32.totalorder %s29, 1
      %p85 = por %p83, %p84
      %p87 = scmp.ne.s32.totalorder %s72, %s86
      %p88 = scmp.eq.s32.totalorder %s29, 0
      %p89 = por %p87, %p88
      %s91 = sadd.s32 %s90, 1
      %p94 = scmp.eq.s32.totalorder %s23, 1
      %p95 = scmp.ne.s32.totalorder %s90, %s92
      %p96 = scmp.eq.s32.totalorder %s23, 0
      %p97 = por %p95, %p96
      %p98 = scmp.ne.s32.totalorder %s90, %s92
      %p99 = scmp.eq.s32.totalorder %s28, 1
      %p100 = por %p98, %p99
      %p101 = scmp.ne.s32.totalorder %s92, %s93
      %p102 = scmp.eq.s32.totalorder %s28, 0
      %p103 = por %p101, %p102
      %p104 = scmp.ne.s32.totalorder %s92, %s93
      %p105 = scmp.eq.s32.totalorder %s29, 1
      %p106 = por %p104, %p105
      %p108 = scmp.ne.s32.totalorder %s93, %s107
      %p109 = scmp.eq.s32.totalorder %s29, 0
      %p110 = por %p108, %p109
      %s112 = sadd.s32 %s111, 1
      %p115 = scmp.eq.s32.totalorder %s23, 1
      %p116 = scmp.ne.s32.totalorder %s111, %s113
      %p117 = scmp.eq.s32.totalorder %s23, 0
      %p118 = por %p116, %p117
      %p119 = scmp.ne.s32.totalorder %s111, %s113
      %p120 = scmp.eq.s32.totalorder %s28, 1
      %p121 = por %p119, %p120
      %p122 = scmp.ne.s32.totalorder %s113, %s114
      %p123 = scmp.eq.s32.totalorder %s28, 0
      %p124 = por %p122, %p123
      %p125 = scmp.ne.s32.totalorder %s113, %s114
      %p126 = scmp.eq.s32.totalorder %s29, 1
      %p127 = por %p125, %p126
      %p129 = scmp.ne.s32.totalorder %s114, %s128
      %p130 = scmp.eq.s32.totalorder %s29, 0
      %p131 = por %p129, %p130
      %s132 = ssub.s32 %s30, %s42
      %p133 = scmp.eq.s32.totalorder %s132, 0
      %s135 = sadd.s32 %s134, 1
      %s136 = scalar_select %p133, %s134, %s135
      %p139 = pneg %p133
      %p140 = scmp.eq.s32.totalorder %s23, 1
      %p141 = por %p139, %p140
      %p142 = scmp.ne.s32.totalorder %s134, %s137
      %p143 = scmp.eq.s32.totalorder %s23, 0
      %p144 = por %p142, %p143
      %p145 = scmp.ne.s32.totalorder %s134, %s137
      %p146 = scmp.eq.s32.totalorder %s28, 1
      %p147 = por %p145, %p146
      %p148 = scmp.ne.s32.totalorder %s137, %s138
      %p149 = scmp.eq.s32.totalorder %s28, 0
      %p150 = por %p148, %p149
      %p151 = scmp.ne.s32.totalorder %s137, %s138
      %p152 = scmp.eq.s32.totalorder %s29, 1
      %p153 = por %p151, %p152
      %p155 = scmp.ne.s32.totalorder %s138, %s154
      %p156 = scmp.eq.s32.totalorder %s29, 0
      %p157 = por %p155, %p156
      %s158 = ssub.s32 %s30, %s42
      %s159 = ssub.s32 %s31, %s38
      %s160 = sor.u32 %s158, %s159
      %p161 = scmp.eq.s32.totalorder %s160, 0
      %s163 = sadd.s32 %s162, 1
      %s164 = scalar_select %p161, %s162, %s163
      %p167 = pneg %p161
      %p168 = scmp.eq.s32.totalorder %s23, 1
      %p169 = por %p167, %p168
      %p170 = scmp.ne.s32.totalorder %s162, %s165
      %p171 = scmp.eq.s32.totalorder %s23, 0
      %p172 = por %p170, %p171
      %p173 = scmp.ne.s32.totalorder %s162, %s165
      %p174 = scmp.eq.s32.totalorder %s28, 1
      %p175 = por %p173, %p174
      %p176 = scmp.ne.s32.totalorder %s165, %s166
      %p177 = scmp.eq.s32.totalorder %s28, 0
      %p178 = por %p176, %p177
      %p179 = scmp.ne.s32.totalorder %s165, %s166
      %p180 = scmp.eq.s32.totalorder %s29, 1
      %p181 = por %p179, %p180
      %p183 = scmp.ne.s32.totalorder %s166, %s182
      %p184 = scmp.eq.s32.totalorder %s29, 0
      %p185 = por %p183, %p184
      %p186 = scmp.le.s32.totalorder 1, %s23
      %p187 = scmp.lt.s32.totalorder %s23, 3
      %p188 = pnand %p186, %p187
      %p189 = pneg %p188
      // Predicated region
      $region9: #{tpu_custom_call.1} parent=5 // pred_check
        _
      $region10: #{tpu_custom_call.1} parent=5 // pred_check_branch
        %191 = sbr.rel (%p188) target = $region12
      $region11: #{tpu_custom_call.1} parent=5 // pred_region
        %s192 = ssub.s32 %s23, 1
        // Predicated region
        $region13: #{tpu_custom_call.1} parent=11 // pred_check
          %p193 = pneg %p82
        $region14: #{tpu_custom_call.1} parent=11 // pred_check_branch
          %195 = sbr.rel (%p193) target = $region16
        $region15: #{tpu_custom_call.1} parent=11 // pred_region
          %s197 = ssub.s32 512, 512
          %198 = vsyncadd [#allocation8], %s197
          %s199 = sshll.u32 [#allocation7], 4
          %s200 = int_to_ptr.vmem [resolvable:$true] %s199
          %205 = dma.hbm_to_vmem [thread:$0]  %s1, 512, %s200, [#allocation8], 128, 128, 8
        $region16: #{tpu_custom_call.1} parent=11 // pred_fallthru
          _
        // Predicated region
        $region17: #{tpu_custom_call.1} parent=11 // pred_check
          %p206 = pneg %p103
        $region18: #{tpu_custom_call.1} parent=11 // pred_check_branch
          %208 = sbr.rel (%p206) target = $region20
        $region19: #{tpu_custom_call.1} parent=11 // pred_region
          %s210 = ssub.s32 512, 512
          %211 = vsyncadd [#allocation8], %s210
          %s212 = sshll.u32 [#allocation9], 4
          %s213 = int_to_ptr.vmem [resolvable:$true] %s212
          %218 = dma.hbm_to_vmem [thread:$0]  %s2, 512, %s213, [#allocation8], 128, 128, 8
        $region20: #{tpu_custom_call.1} parent=11 // pred_fallthru
          _
        // Predicated region
        $region21: #{tpu_custom_call.1} parent=11 // pred_check
          %p219 = pneg %p124
        $region22: #{tpu_custom_call.1} parent=11 // pred_check_branch
          %221 = sbr.rel (%p219) target = $region24
        $region23: #{tpu_custom_call.1} parent=11 // pred_region
          %s223 = ssub.s32 16, 16
          %224 = vsyncadd [#allocation11], %s223
          %s226 = sshll.u32 [#allocation10], 4
          %s227 = int_to_ptr.vmem [resolvable:$true] %s226
          %229 = dma.hbm_to_vmem [thread:$0]  %s3, 16, %s227, [#allocation11]
        $region24: #{tpu_custom_call.1} parent=11 // pred_fallthru
          _
      $region12: #{tpu_custom_call.1} parent=5 // pred_fallthru
        _
      %p230 = scmp.lt.s32.totalorder %s23, 2
      // Predicated region
      $region25: #{tpu_custom_call.1} parent=5 // pred_check
        %p231 = pneg %p230
      $region26: #{tpu_custom_call.1} parent=5 // pred_check_branch
        %233 = sbr.rel (%p231) target = $region28
      $region27: #{tpu_custom_call.1} parent=5 // pred_region
        // Predicated region
        $region29: #{tpu_custom_call.1} parent=27 // pred_check
          %p234 = pneg %p55
        $region30: #{tpu_custom_call.1} parent=27 // pred_check_branch
          %236 = sbr.rel (%p234) target = $region32
        $region31: #{tpu_custom_call.1} parent=27 // pred_region
          %s237 = sand.u32 %s45, 1
          %s238 = scalar_lea.sflag [#allocation5], %s237
          %s239 = sand.u32 %s45, 1
          %s240 = smul.addr %s239, 8
          %s241 = scalar_lea.vmem [#allocation4], %s240
          %s243 = ssub.s32 128, 128
          %244 = vsyncadd %s238, %s243
          %s245 = smul.addr %s30, 128
          %s246 = scalar_lea.hbm %s0, %s245
          %s248 = sshll.u32 %s241, 4
          %s249 = int_to_ptr.vmem [resolvable:$true] %s248
          %251 = dma.hbm_to_vmem [thread:$0]  %s246, 128, %s249, %s238
        $region32: #{tpu_custom_call.1} parent=27 // pred_fallthru
          _
      $region28: #{tpu_custom_call.1} parent=5 // pred_fallthru
        _
      %p252 = scmp.le.s32.totalorder 1, %s23
      %p253 = scmp.lt.s32.totalorder %s23, 3
      %p254 = pnand %p252, %p253
      %p255 = pneg %p254
      // Predicated region
      $region33: #{tpu_custom_call.1} parent=5 // pred_check
        _
      $region34: #{tpu_custom_call.1} parent=5 // pred_check_branch
        %257 = sbr.rel (%p254) target = $region36
      $region35: #{tpu_custom_call.1} parent=5 // pred_region
        %s258 = ssub.s32 %s23, 1
        %s259 = sand.u32 %s48, 1
        %s260 = scalar_lea.sflag [#allocation5], %s259
        %s261 = sand.u32 %s48, 1
        %s262 = smul.addr %s261, 8
        %s263 = scalar_lea.vmem [#allocation4], %s262
        // Predicated region
        $region37: #{tpu_custom_call.1} parent=35 // pred_check
          %p264 = pneg %p61
        $region38: #{tpu_custom_call.1} parent=35 // pred_check_branch
          %266 = sbr.rel (%p264) target = $region40
        $region39: #{tpu_custom_call.1} parent=35 // pred_region
          %267 = dma.done %s260, 128
        $region40: #{tpu_custom_call.1} parent=35 // pred_fallthru
          _
        // Predicated region
        $region41: #{tpu_custom_call.1} parent=35 // pred_check
          %p268 = pneg %p82
        $region42: #{tpu_custom_call.1} parent=35 // pred_check_branch
          %270 = sbr.rel (%p268) target = $region44
        $region43: #{tpu_custom_call.1} parent=35 // pred_region
          %271 = dma.done [#allocation8], 512
        $region44: #{tpu_custom_call.1} parent=35 // pred_fallthru
          _
        // Predicated region
        $region45: #{tpu_custom_call.1} parent=35 // pred_check
          %p272 = pneg %p103
        $region46: #{tpu_custom_call.1} parent=35 // pred_check_branch
          %274 = sbr.rel (%p272) target = $region48
        $region47: #{tpu_custom_call.1} parent=35 // pred_region
          %275 = dma.done [#allocation8], 512
        $region48: #{tpu_custom_call.1} parent=35 // pred_fallthru
          _
        // Predicated region
        $region49: #{tpu_custom_call.1} parent=35 // pred_check
          %p276 = pneg %p124
        $region50: #{tpu_custom_call.1} parent=35 // pred_check_branch
          %278 = sbr.rel (%p276) target = $region52
        $region51: #{tpu_custom_call.1} parent=35 // pred_region
          %279 = dma.done [#allocation11], 16
        $region52: #{tpu_custom_call.1} parent=35 // pred_fallthru
          _
        %s280 = sand.u32 %s48, 1
        %s281 = scalar_lea.sflag [#allocation5], %s280
        %s282 = sand.u32 %s48, 1
        %s283 = smul.addr %s282, 8
        %s284 = scalar_lea.vmem [#allocation4], %s283
        %p285 = pneg %p61
        %p286 = pneg %p58
        %p287 = pneg %p82
        %p288 = pneg %p79
        %p289 = pneg %p103
        %p290 = pneg %p100
        %p291 = pneg %p124
        %p292 = pneg %p121
        %p293 = pneg %p150
        %p294 = pneg %p147
        %s295 = sand.u32 %s137, 1
        %s296 = scalar_lea.sflag [#allocation6], %s295
        %s297 = sand.u32 %s137, 1
        %s298 = smul.addr %s297, 8
        %s299 = scalar_lea.vmem [#allocation12], %s298
        %p300 = pneg %p178
        %p301 = pneg %p175
        %s302 = sand.u32 %s165, 1
        %s303 = scalar_lea.sflag [#allocation14], %s302
        %s304 = sand.u32 %s165, 1
        %s305 = smul.addr %s304, 32
        %s306 = scalar_lea.vmem [#allocation13], %s305
        %s307 = smul.u32 4, %s33
        %p308 = scmp.eq.s32.totalorder %s33, 0
        // Predicated region
        $region53: #{tpu_custom_call.1} parent=35 // pred_check
          %p309 = pneg %p308
        $region54: #{tpu_custom_call.1} parent=35 // pred_check_branch
          %311 = sbr.rel (%p309) target = $region56
        $region55: #{tpu_custom_call.1} parent=35 // pred_region
          %vm312 = vcmask 261120
          %313 = vst.msk [vmem:[#allocation2] sm:$0xff] %vm312, 0.0
        $region56: #{tpu_custom_call.1} parent=35 // pred_fallthru
          _
        %v314 = vld [vmem:[%s263] sm:$0xff]
        %s315 = smul.u32 %s33, 32
        %s316 = scalar_lea.vmem [#allocation7], %s315
        %v317 = vld [vmem:[%s316] sm:$0xff]
        %v318 = vld [vmem:[%s316 + $0x8] sm:$0xff]
        %v319 = vld [vmem:[%s316 + $0x10] sm:$0xff]
        %v320 = vld [vmem:[%s316 + $0x18] sm:$0xff]
        %vm321 = vcmask 261120
        %v323 = vsel %vm321, %v314, 0
        %325 = vmatprep.subr.mxu0 0.0
        %326 = vmatpush1.msra.mxu0 %v317
        %327 = vmatprep.subr.mxu0 0.0
        %328 = vmatpush1.msra.mxu0 %v318
        %329 = vmatprep.subr.mxu0 0.0
        %330 = vmatpush1.msra.mxu0 %v319
        %331 = vmatprep.subr.mxu0 0.0
        %332 = vmatpush1.msra.mxu0 %v320
        %333 = vmatprep.subr.mxu0 0.0
        %334 = vmatpush1.msra.mxu0 0.0
        %335 = vmatprep.subr.mxu0 0.0
        %336 = vmatpush1.msra.mxu0 0.0
        %337 = vmatprep.subr.mxu0 0.0
        %338 = vmatpush1.msra.mxu0 0.0
        %339 = vmatprep.subr.mxu0 0.0
        %340 = vmatpush1.msra.mxu0 0.0
        %341 = vmatprep.subr.mxu0 0.0
        %342 = vmatpush1.msra.mxu0 0.0
        %343 = vmatprep.subr.mxu0 0.0
        %344 = vmatpush1.msra.mxu0 0.0
        %345 = vmatprep.subr.mxu0 0.0
        %346 = vmatpush1.msra.mxu0 0.0
        %347 = vmatprep.subr.mxu0 0.0
        %348 = vmatpush1.msra.mxu0 0.0
        %349 = vmatprep.subr.mxu0 0.0
        %350 = vmatpush1.msra.mxu0 0.0
        %351 = vmatprep.subr.mxu0 0.0
        %352 = vmatpush1.msra.mxu0 0.0
        %353 = vmatprep.subr.mxu0 0.0
        %354 = vmatpush1.msra.mxu0 0.0
        %355 = vmatprep.subr.mxu0 0.0
        %356 = vmatpush1.msra.mxu0 0.0
        %357 = vmatprep.subr.mxu0 0.0
        %358 = vmatpush1.msra.mxu0 0.0
        %359 = vmatprep.subr.mxu0 0.0
        %360 = vmatpush1.msra.mxu0 0.0
        %361 = vmatprep.subr.mxu0 0.0
        %362 = vmatpush1.msra.mxu0 0.0
        %363 = vmatprep.subr.mxu0 0.0
        %364 = vmatpush1.msra.mxu0 0.0
        %365 = vmatprep.subr.mxu0 0.0
        %366 = vmatpush1.msra.mxu0 0.0
        %367 = vmatprep.subr.mxu0 0.0
        %368 = vmatpush1.msra.mxu0 0.0
        %369 = vmatprep.subr.mxu0 0.0
        %370 = vmatpush1.msra.mxu0 0.0
        %371 = vmatprep.subr.mxu0 0.0
        %372 = vmatpush1.msra.mxu0 0.0
        %373 = vmatprep.subr.mxu0 0.0
        %374 = vmatpush1.msra.mxu0 0.0
        %375 = vmatprep.subr.mxu0 0.0
        %376 = vmatpush1.msra.mxu0 0.0
        %377 = vmatprep.subr.mxu0 0.0
        %378 = vmatpush1.msra.mxu0 0.0
        %379 = vmatprep.subr.mxu0 0.0
        %380 = vmatpush1.msra.mxu0 0.0
        %381 = vmatprep.subr.mxu0 0.0
        %382 = vmatpush1.msra.mxu0 0.0
        %383 = vmatprep.subr.mxu0 0.0
        %384 = vmatpush1.msra.mxu0 0.0
        %385 = vmatprep.subr.mxu0 0.0
        %386 = vmatpush1.msra.mxu0 0.0
        %387 = vmatprep.subr.mxu0 0.0
        %388 = vmatpush1.msra.mxu0 0.0
        %389 = vmatprep.mubr.f32.mxu0 0.0
        %390 = vmatmul.mubr.f32.gmra.mrb[0].mxu0 %v323
        %v391 = vpop.f32.mrb[0].mxu0
        %v392 = vadd.f32 0.0, %v391
        %v393 = vpop.f32.mrb[0].mxu0
        %394 = vdwg.mxu0
        %396 = vrot.lane.b32.xlu0 %v392, 96
        %v397 = vpop.permute.xlu0 %396
        %vm398 = vcmask 64512
        %v399 = vsel %vm398, %v392, 0
        %v401 = vsel %vm398, %v397, 0
        %403 = vmatprep.subr.mxu0 0.0
        %404 = vmatpush1.xpose.msra.mxu0 %v401
        %405 = vmatprep.subr.mxu0 0.0
        %406 = vmatpush1.xpose.msra.mxu0 0.0
        %407 = vmatprep.subr.mxu0 0.0
        %408 = vmatpush1.xpose.msra.mxu0 0.0
        %409 = vmatprep.subr.mxu0 0.0
        %410 = vmatpush1.xpose.msra.mxu0 0.0
        %411 = vmatprep.subr.mxu0 0.0
        %412 = vmatpush1.xpose.msra.mxu0 0.0
        %413 = vmatprep.subr.mxu0 0.0
        %414 = vmatpush1.xpose.msra.mxu0 0.0
        %415 = vmatprep.subr.mxu0 0.0
        %416 = vmatpush1.xpose.msra.mxu0 0.0
        %417 = vmatprep.subr.mxu0 0.0
        %418 = vmatpush1.xpose.msra.mxu0 0.0
        %419 = vmatprep.subr.mxu0 0.0
        %420 = vmatpush1.xpose.msra.mxu0 0.0
        %421 = vmatprep.subr.mxu0 0.0
        %422 = vmatpush1.xpose.msra.mxu0 0.0
        %423 = vmatprep.subr.mxu0 0.0
        %424 = vmatpush1.xpose.msra.mxu0 0.0
        %425 = vmatprep.subr.mxu0 0.0
        %426 = vmatpush1.xpose.msra.mxu0 0.0
        %427 = vmatprep.subr.mxu0 0.0
        %428 = vmatpush1.xpose.msra.mxu0 0.0
        %429 = vmatprep.subr.mxu0 0.0
        %430 = vmatpush1.xpose.msra.mxu0 0.0
        %431 = vmatprep.subr.mxu0 0.0
        %432 = vmatpush1.xpose.msra.mxu0 0.0
        %433 = vmatprep.subr.mxu0 0.0
        %434 = vmatpush1.xpose.msra.mxu0 0.0
        %435 = vmatprep.subr.mxu0 0.0
        %436 = vmatpush1.xpose.msra.mxu0 0.0
        %437 = vmatprep.subr.mxu0 0.0
        %438 = vmatpush1.xpose.msra.mxu0 0.0
        %439 = vmatprep.subr.mxu0 0.0
        %440 = vmatpush1.xpose.msra.mxu0 0.0
        %441 = vmatprep.subr.mxu0 0.0
        %442 = vmatpush1.xpose.msra.mxu0 0.0
        %443 = vmatprep.subr.mxu0 0.0
        %444 = vmatpush1.xpose.msra.mxu0 0.0
        %445 = vmatprep.subr.mxu0 0.0
        %446 = vmatpush1.xpose.msra.mxu0 0.0
        %447 = vmatprep.subr.mxu0 0.0
        %448 = vmatpush1.xpose.msra.mxu0 0.0
        %449 = vmatprep.subr.mxu0 0.0
        %450 = vmatpush1.xpose.msra.mxu0 0.0
        %451 = vmatprep.subr.mxu0 0.0
        %452 = vmatpush1.xpose.msra.mxu0 0.0
        %453 = vmatprep.subr.mxu0 0.0
        %454 = vmatpush1.xpose.msra.mxu0 0.0
        %455 = vmatprep.subr.mxu0 0.0
        %456 = vmatpush1.xpose.msra.mxu0 0.0
        %457 = vmatprep.subr.mxu0 0.0
        %458 = vmatpush1.xpose.msra.mxu0 0.0
        %459 = vmatprep.subr.mxu0 0.0
        %460 = vmatpush1.xpose.msra.mxu0 0.0
        %461 = vmatprep.subr.mxu0 0.0
        %462 = vmatpush1.xpose.msra.mxu0 0.0
        %463 = vmatprep.subr.mxu0 0.0
        %464 = vmatpush1.xpose.msra.mxu0 0.0
        %465 = vmatprep.subr.mxu0 0.0
        %466 = vmatpush1.xpose.msra.mxu0 0.0
        %467 = vmatprep.mubr.f32.mxu0 0.0
        %468 = vmatmul.mubr.f32.gmra.mrb[0].mxu0 %v399
        %v469 = vpop.f32.mrb[0].mxu0
        %v470 = vadd.f32 0.0, %v469
        %v471 = vpop.f32.mrb[0].mxu0
        %472 = vdwg.mxu0
        %v473 = vsel %vm398, %v470, -inf
        %474 = vmax.xlane.f32.xlu0 %v473
        %v475 = vpop.xlane.xlu0 %474
        %v476 = vsub.f32 %v470, %v475
        %v477 = vmul.f32 %v476, 1.442695
        %v478 = vpow.pop %v477
        %v479 = vsel %vm398, %v478, 0.0
        %480 = vadd.xlane.f32.xlu0 %v479
        %v481 = vpop.xlane.xlu0 %480
        %v482 = vrcp.pop %v481
        %v483 = vmul.f32 %v478, %v482
        %484 = vst.msk [vmem:[%s306] sm:$0xff] %vm398, %v483
        %485 = vrot.lane.b32.xlu0 %v392, 64
        %v486 = vpop.permute.xlu0 %485
        %v489 = vsel %vm398, %v483, 0
        %491 = vmatprep.subr.mxu0 0.0
        %492 = vmatpush1.msra.mxu0 %v486
        %493 = vmatprep.subr.mxu0 0.0
        %494 = vmatpush1.msra.mxu0 0.0
        %495 = vmatprep.subr.mxu0 0.0
        %496 = vmatpush1.msra.mxu0 0.0
        %497 = vmatprep.subr.mxu0 0.0
        %498 = vmatpush1.msra.mxu0 0.0
        %499 = vmatprep.subr.mxu0 0.0
        %500 = vmatpush1.msra.mxu0 0.0
        %501 = vmatprep.subr.mxu0 0.0
        %502 = vmatpush1.msra.mxu0 0.0
        %503 = vmatprep.subr.mxu0 0.0
        %504 = vmatpush1.msra.mxu0 0.0
        %505 = vmatprep.subr.mxu0 0.0
        %506 = vmatpush1.msra.mxu0 0.0
        %507 = vmatprep.subr.mxu0 0.0
        %508 = vmatpush1.msra.mxu0 0.0
        %509 = vmatprep.subr.mxu0 0.0
        %510 = vmatpush1.msra.mxu0 0.0
        %511 = vmatprep.subr.mxu0 0.0
        %512 = vmatpush1.msra.mxu0 0.0
        %513 = vmatprep.subr.mxu0 0.0
        %514 = vmatpush1.msra.mxu0 0.0
        %515 = vmatprep.subr.mxu0 0.0
        %516 = vmatpush1.msra.mxu0 0.0
        %517 = vmatprep.subr.mxu0 0.0
        %518 = vmatpush1.msra.mxu0 0.0
        %519 = vmatprep.subr.mxu0 0.0
        %520 = vmatpush1.msra.mxu0 0.0
        %521 = vmatprep.subr.mxu0 0.0
        %522 = vmatpush1.msra.mxu0 0.0
        %523 = vmatprep.subr.mxu0 0.0
        %524 = vmatpush1.msra.mxu0 0.0
        %525 = vmatprep.subr.mxu0 0.0
        %526 = vmatpush1.msra.mxu0 0.0
        %527 = vmatprep.subr.mxu0 0.0
        %528 = vmatpush1.msra.mxu0 0.0
        %529 = vmatprep.subr.mxu0 0.0
        %530 = vmatpush1.msra.mxu0 0.0
        %531 = vmatprep.subr.mxu0 0.0
        %532 = vmatpush1.msra.mxu0 0.0
        %533 = vmatprep.subr.mxu0 0.0
        %534 = vmatpush1.msra.mxu0 0.0
        %535 = vmatprep.subr.mxu0 0.0
        %536 = vmatpush1.msra.mxu0 0.0
        %537 = vmatprep.subr.mxu0 0.0
        %538 = vmatpush1.msra.mxu0 0.0
        %539 = vmatprep.subr.mxu0 0.0
        %540 = vmatpush1.msra.mxu0 0.0
        %541 = vmatprep.subr.mxu0 0.0
        %542 = vmatpush1.msra.mxu0 0.0
        %543 = vmatprep.subr.mxu0 0.0
        %544 = vmatpush1.msra.mxu0 0.0
        %545 = vmatprep.subr.mxu0 0.0
        %546 = vmatpush1.msra.mxu0 0.0
        %547 = vmatprep.subr.mxu0 0.0
        %548 = vmatpush1.msra.mxu0 0.0
        %549 = vmatprep.subr.mxu0 0.0
        %550 = vmatpush1.msra.mxu0 0.0
        %551 = vmatprep.subr.mxu0 0.0
        %552 = vmatpush1.msra.mxu0 0.0
        %553 = vmatprep.subr.mxu0 0.0
        %554 = vmatpush1.msra.mxu0 0.0
        %555 = vmatprep.mubr.f32.mxu0 0.0
        %556 = vmatmul.mubr.f32.gmra.mrb[0].mxu0 %v489
        %v557 = vpop.f32.mrb[0].mxu0
        %v558 = vadd.f32 0.0, %v557
        %v559 = vpop.f32.mrb[0].mxu0
        %560 = vdwg.mxu0
        %561 = vst.msk [vmem:[#allocation3] sm:$0xff] %vm398, %v558
        %562 = vrot.lane.b32.xlu0 %v392, 120
        %v563 = vpop.permute.xlu0 %562
        %564 = vrot.lane.b32.xlu0 %v392, 88
        %v565 = vpop.permute.xlu0 %564
        %v566 = vsel %vm398, %v563, 0
        %v568 = vsel %vm398, %v565, 0
        %570 = vmatprep.subr.mxu0 0.0
        %571 = vmatpush1.xpose.msra.mxu0 %v568
        %572 = vmatprep.subr.mxu0 0.0
        %573 = vmatpush1.xpose.msra.mxu0 0.0
        %574 = vmatprep.subr.mxu0 0.0
        %575 = vmatpush1.xpose.msra.mxu0 0.0
        %576 = vmatprep.subr.mxu0 0.0
        %577 = vmatpush1.xpose.msra.mxu0 0.0
        %578 = vmatprep.subr.mxu0 0.0
        %579 = vmatpush1.xpose.msra.mxu0 0.0
        %580 = vmatprep.subr.mxu0 0.0
        %581 = vmatpush1.xpose.msra.mxu0 0.0
        %582 = vmatprep.subr.mxu0 0.0
        %583 = vmatpush1.xpose.msra.mxu0 0.0
        %584 = vmatprep.subr.mxu0 0.0
        %585 = vmatpush1.xpose.msra.mxu0 0.0
        %586 = vmatprep.subr.mxu0 0.0
        %587 = vmatpush1.xpose.msra.mxu0 0.0
        %588 = vmatprep.subr.mxu0 0.0
        %589 = vmatpush1.xpose.msra.mxu0 0.0
        %590 = vmatprep.subr.mxu0 0.0
        %591 = vmatpush1.xpose.msra.mxu0 0.0
        %592 = vmatprep.subr.mxu0 0.0
        %593 = vmatpush1.xpose.msra.mxu0 0.0
        %594 = vmatprep.subr.mxu0 0.0
        %595 = vmatpush1.xpose.msra.mxu0 0.0
        %596 = vmatprep.subr.mxu0 0.0
        %597 = vmatpush1.xpose.msra.mxu0 0.0
        %598 = vmatprep.subr.mxu0 0.0
        %599 = vmatpush1.xpose.msra.mxu0 0.0
        %600 = vmatprep.subr.mxu0 0.0
        %601 = vmatpush1.xpose.msra.mxu0 0.0
        %602 = vmatprep.subr.mxu0 0.0
        %603 = vmatpush1.xpose.msra.mxu0 0.0
        %604 = vmatprep.subr.mxu0 0.0
        %605 = vmatpush1.xpose.msra.mxu0 0.0
        %606 = vmatprep.subr.mxu0 0.0
        %607 = vmatpush1.xpose.msra.mxu0 0.0
        %608 = vmatprep.subr.mxu0 0.0
        %609 = vmatpush1.xpose.msra.mxu0 0.0
        %610 = vmatprep.subr.mxu0 0.0
        %611 = vmatpush1.xpose.msra.mxu0 0.0
        %612 = vmatprep.subr.mxu0 0.0
        %613 = vmatpush1.xpose.msra.mxu0 0.0
        %614 = vmatprep.subr.mxu0 0.0
        %615 = vmatpush1.xpose.msra.mxu0 0.0
        %616 = vmatprep.subr.mxu0 0.0
        %617 = vmatpush1.xpose.msra.mxu0 0.0
        %618 = vmatprep.subr.mxu0 0.0
        %619 = vmatpush1.xpose.msra.mxu0 0.0
        %620 = vmatprep.subr.mxu0 0.0
        %621 = vmatpush1.xpose.msra.mxu0 0.0
        %622 = vmatprep.subr.mxu0 0.0
        %623 = vmatpush1.xpose.msra.mxu0 0.0
        %624 = vmatprep.subr.mxu0 0.0
        %625 = vmatpush1.xpose.msra.mxu0 0.0
        %626 = vmatprep.subr.mxu0 0.0
        %627 = vmatpush1.xpose.msra.mxu0 0.0
        %628 = vmatprep.subr.mxu0 0.0
        %629 = vmatpush1.xpose.msra.mxu0 0.0
        %630 = vmatprep.subr.mxu0 0.0
        %631 = vmatpush1.xpose.msra.mxu0 0.0
        %632 = vmatprep.subr.mxu0 0.0
        %633 = vmatpush1.xpose.msra.mxu0 0.0
        %634 = vmatprep.mubr.f32.mxu0 0.0
        %635 = vmatmul.mubr.f32.gmra.mrb[0].mxu0 %v566
        %v636 = vpop.f32.mrb[0].mxu0
        %v637 = vadd.f32 0.0, %v636
        %v638 = vpop.f32.mrb[0].mxu0
        %639 = vdwg.mxu0
        %v640 = vsel %vm398, %v637, -inf
        %641 = vmax.xlane.f32.xlu0 %v640
        %v642 = vpop.xlane.xlu0 %641
        %v643 = vsub.f32 %v637, %v642
        %v644 = vmul.f32 %v643, 1.442695
        %v645 = vpow.pop %v644
        %v646 = vsel %vm398, %v645, 0.0
        %647 = vadd.xlane.f32.xlu0 %v646
        %v648 = vpop.xlane.xlu0 %647
        %v649 = vrcp.pop %v648
        %v650 = vmul.f32 %v645, %v649
        %s651 = scalar_lea.vmem %s306, 8 [#allocation13]
        %652 = vst.msk [vmem:[%s651] sm:$0xff] %vm398, %v650
        %653 = vrot.lane.b32.xlu0 %v392, 56
        %v654 = vpop.permute.xlu0 %653
        %v657 = vsel %vm398, %v650, 0
        %659 = vmatprep.subr.mxu0 0.0
        %660 = vmatpush1.msra.mxu0 %v654
        %661 = vmatprep.subr.mxu0 0.0
        %662 = vmatpush1.msra.mxu0 0.0
        %663 = vmatprep.subr.mxu0 0.0
        %664 = vmatpush1.msra.mxu0 0.0
        %665 = vmatprep.subr.mxu0 0.0
        %666 = vmatpush1.msra.mxu0 0.0
        %667 = vmatprep.subr.mxu0 0.0
        %668 = vmatpush1.msra.mxu0 0.0
        %669 = vmatprep.subr.mxu0 0.0
        %670 = vmatpush1.msra.mxu0 0.0
        %671 = vmatprep.subr.mxu0 0.0
        %672 = vmatpush1.msra.mxu0 0.0
        %673 = vmatprep.subr.mxu0 0.0
        %674 = vmatpush1.msra.mxu0 0.0
        %675 = vmatprep.subr.mxu0 0.0
        %676 = vmatpush1.msra.mxu0 0.0
        %677 = vmatprep.subr.mxu0 0.0
        %678 = vmatpush1.msra.mxu0 0.0
        %679 = vmatprep.subr.mxu0 0.0
        %680 = vmatpush1.msra.mxu0 0.0
        %681 = vmatprep.subr.mxu0 0.0
        %682 = vmatpush1.msra.mxu0 0.0
        %683 = vmatprep.subr.mxu0 0.0
        %684 = vmatpush1.msra.mxu0 0.0
        %685 = vmatprep.subr.mxu0 0.0
        %686 = vmatpush1.msra.mxu0 0.0
        %687 = vmatprep.subr.mxu0 0.0
        %688 = vmatpush1.msra.mxu0 0.0
        %689 = vmatprep.subr.mxu0 0.0
        %690 = vmatpush1.msra.mxu0 0.0
        %691 = vmatprep.subr.mxu0 0.0
        %692 = vmatpush1.msra.mxu0 0.0
        %693 = vmatprep.subr.mxu0 0.0
        %694 = vmatpush1.msra.mxu0 0.0
        %695 = vmatprep.subr.mxu0 0.0
        %696 = vmatpush1.msra.mxu0 0.0
        %697 = vmatprep.subr.mxu0 0.0
        %698 = vmatpush1.msra.mxu0 0.0
        %699 = vmatprep.subr.mxu0 0.0
        %700 = vmatpush1.msra.mxu0 0.0
        %701 = vmatprep.subr.mxu0 0.0
        %702 = vmatpush1.msra.mxu0 0.0
        %703 = vmatprep.subr.mxu0 0.0
        %704 = vmatpush1.msra.mxu0 0.0
        %705 = vmatprep.subr.mxu0 0.0
        %706 = vmatpush1.msra.mxu0 0.0
        %707 = vmatprep.subr.mxu0 0.0
        %708 = vmatpush1.msra.mxu0 0.0
        %709 = vmatprep.subr.mxu0 0.0
        %710 = vmatpush1.msra.mxu0 0.0
        %711 = vmatprep.subr.mxu0 0.0
        %712 = vmatpush1.msra.mxu0 0.0
        %713 = vmatprep.subr.mxu0 0.0
        %714 = vmatpush1.msra.mxu0 0.0
        %715 = vmatprep.subr.mxu0 0.0
        %716 = vmatpush1.msra.mxu0 0.0
        %717 = vmatprep.subr.mxu0 0.0
        %718 = vmatpush1.msra.mxu0 0.0
        %719 = vmatprep.subr.mxu0 0.0
        %720 = vmatpush1.msra.mxu0 0.0
        %721 = vmatprep.subr.mxu0 0.0
        %722 = vmatpush1.msra.mxu0 0.0
        %723 = vmatprep.mubr.f32.mxu0 0.0
        %724 = vmatmul.mubr.f32.gmra.mrb[0].mxu0 %v657
        %v725 = vpop.f32.mrb[0].mxu0
        %v726 = vadd.f32 0.0, %v725
        %v727 = vpop.f32.mrb[0].mxu0
        %728 = vdwg.mxu0
        %730 = vrot.lane.b32.xlu0 %v726, 8
        %v731 = vpop.permute.xlu0 %730
        %vm733 = vcmask 130112
        %734 = vst.msk [vmem:[#allocation3] sm:$0xff] %vm733, %v731
        %735 = vrot.lane.b32.xlu0 %v392, 112
        %v736 = vpop.permute.xlu0 %735
        %737 = vrot.lane.b32.xlu0 %v392, 80
        %v738 = vpop.permute.xlu0 %737
        %v739 = vsel %vm398, %v736, 0
        %v741 = vsel %vm398, %v738, 0
        %743 = vmatprep.subr.mxu0 0.0
        %744 = vmatpush1.xpose.msra.mxu0 %v741
        %745 = vmatprep.subr.mxu0 0.0
        %746 = vmatpush1.xpose.msra.mxu0 0.0
        %747 = vmatprep.subr.mxu0 0.0
        %748 = vmatpush1.xpose.msra.mxu0 0.0
        %749 = vmatprep.subr.mxu0 0.0
        %750 = vmatpush1.xpose.msra.mxu0 0.0
        %751 = vmatprep.subr.mxu0 0.0
        %752 = vmatpush1.xpose.msra.mxu0 0.0
        %753 = vmatprep.subr.mxu0 0.0
        %754 = vmatpush1.xpose.msra.mxu0 0.0
        %755 = vmatprep.subr.mxu0 0.0
        %756 = vmatpush1.xpose.msra.mxu0 0.0
        %757 = vmatprep.subr.mxu0 0.0
        %758 = vmatpush1.xpose.msra.mxu0 0.0
        %759 = vmatprep.subr.mxu0 0.0
        %760 = vmatpush1.xpose.msra.mxu0 0.0
        %761 = vmatprep.subr.mxu0 0.0
        %762 = vmatpush1.xpose.msra.mxu0 0.0
        %763 = vmatprep.subr.mxu0 0.0
        %764 = vmatpush1.xpose.msra.mxu0 0.0
        %765 = vmatprep.subr.mxu0 0.0
        %766 = vmatpush1.xpose.msra.mxu0 0.0
        %767 = vmatprep.subr.mxu0 0.0
        %768 = vmatpush1.xpose.msra.mxu0 0.0
        %769 = vmatprep.subr.mxu0 0.0
        %770 = vmatpush1.xpose.msra.mxu0 0.0
        %771 = vmatprep.subr.mxu0 0.0
        %772 = vmatpush1.xpose.msra.mxu0 0.0
        %773 = vmatprep.subr.mxu0 0.0
        %774 = vmatpush1.xpose.msra.mxu0 0.0
        %775 = vmatprep.subr.mxu0 0.0
        %776 = vmatpush1.xpose.msra.mxu0 0.0
        %777 = vmatprep.subr.mxu0 0.0
        %778 = vmatpush1.xpose.msra.mxu0 0.0
        %779 = vmatprep.subr.mxu0 0.0
        %780 = vmatpush1.xpose.msra.mxu0 0.0
        %781 = vmatprep.subr.mxu0 0.0
        %782 = vmatpush1.xpose.msra.mxu0 0.0
        %783 = vmatprep.subr.mxu0 0.0
        %784 = vmatpush1.xpose.msra.mxu0 0.0
        %785 = vmatprep.subr.mxu0 0.0
        %786 = vmatpush1.xpose.msra.mxu0 0.0
        %787 = vmatprep.subr.mxu0 0.0
        %788 = vmatpush1.xpose.msra.mxu0 0.0
        %789 = vmatprep.subr.mxu0 0.0
        %790 = vmatpush1.xpose.msra.mxu0 0.0
        %791 = vmatprep.subr.mxu0 0.0
        %792 = vmatpush1.xpose.msra.mxu0 0.0
        %793 = vmatprep.subr.mxu0 0.0
        %794 = vmatpush1.xpose.msra.mxu0 0.0
        %795 = vmatprep.subr.mxu0 0.0
        %796 = vmatpush1.xpose.msra.mxu0 0.0
        %797 = vmatprep.subr.mxu0 0.0
        %798 = vmatpush1.xpose.msra.mxu0 0.0
        %799 = vmatprep.subr.mxu0 0.0
        %800 = vmatpush1.xpose.msra.mxu0 0.0
        %801 = vmatprep.subr.mxu0 0.0
        %802 = vmatpush1.xpose.msra.mxu0 0.0
        %803 = vmatprep.subr.mxu0 0.0
        %804 = vmatpush1.xpose.msra.mxu0 0.0
        %805 = vmatprep.subr.mxu0 0.0
        %806 = vmatpush1.xpose.msra.mxu0 0.0
        %807 = vmatprep.mubr.f32.mxu0 0.0
        %808 = vmatmul.mubr.f32.gmra.mrb[0].mxu0 %v739
        %v809 = vpop.f32.mrb[0].mxu0
        %v810 = vadd.f32 0.0, %v809
        %v811 = vpop.f32.mrb[0].mxu0
        %812 = vdwg.mxu0
        %v813 = vsel %vm398, %v810, -inf
        %814 = vmax.xlane.f32.xlu0 %v813
        %v815 = vpop.xlane.xlu0 %814
        %v816 = vsub.f32 %v810, %v815
        %v817 = vmul.f32 %v816, 1.442695
        %v818 = vpow.pop %v817
        %v819 = vsel %vm398, %v818, 0.0
        %820 = vadd.xlane.f32.xlu0 %v819
        %v821 = vpop.xlane.xlu0 %820
        %v822 = vrcp.pop %v821
        %v823 = vmul.f32 %v818, %v822
        %s824 = scalar_lea.vmem %s306, 16 [#allocation13]
        %825 = vst.msk [vmem:[%s824] sm:$0xff] %vm398, %v823
        %826 = vrot.lane.b32.xlu0 %v392, 48
        %v827 = vpop.permute.xlu0 %826
        %v830 = vsel %vm398, %v823, 0
        %832 = vmatprep.subr.mxu0 0.0
        %833 = vmatpush1.msra.mxu0 %v827
        %834 = vmatprep.subr.mxu0 0.0
        %835 = vmatpush1.msra.mxu0 0.0
        %836 = vmatprep.subr.mxu0 0.0
        %837 = vmatpush1.msra.mxu0 0.0
        %838 = vmatprep.subr.mxu0 0.0
        %839 = vmatpush1.msra.mxu0 0.0
        %840 = vmatprep.subr.mxu0 0.0
        %841 = vmatpush1.msra.mxu0 0.0
        %842 = vmatprep.subr.mxu0 0.0
        %843 = vmatpush1.msra.mxu0 0.0
        %844 = vmatprep.subr.mxu0 0.0
        %845 = vmatpush1.msra.mxu0 0.0
        %846 = vmatprep.subr.mxu0 0.0
        %847 = vmatpush1.msra.mxu0 0.0
        %848 = vmatprep.subr.mxu0 0.0
        %849 = vmatpush1.msra.mxu0 0.0
        %850 = vmatprep.subr.mxu0 0.0
        %851 = vmatpush1.msra.mxu0 0.0
        %852 = vmatprep.subr.mxu0 0.0
        %853 = vmatpush1.msra.mxu0 0.0
        %854 = vmatprep.subr.mxu0 0.0
        %855 = vmatpush1.msra.mxu0 0.0
        %856 = vmatprep.subr.mxu0 0.0
        %857 = vmatpush1.msra.mxu0 0.0
        %858 = vmatprep.subr.mxu0 0.0
        %859 = vmatpush1.msra.mxu0 0.0
        %860 = vmatprep.subr.mxu0 0.0
        %861 = vmatpush1.msra.mxu0 0.0
        %862 = vmatprep.subr.mxu0 0.0
        %863 = vmatpush1.msra.mxu0 0.0
        %864 = vmatprep.subr.mxu0 0.0
        %865 = vmatpush1.msra.mxu0 0.0
        %866 = vmatprep.subr.mxu0 0.0
        %867 = vmatpush1.msra.mxu0 0.0
        %868 = vmatprep.subr.mxu0 0.0
        %869 = vmatpush1.msra.mxu0 0.0
        %870 = vmatprep.subr.mxu0 0.0
        %871 = vmatpush1.msra.mxu0 0.0
        %872 = vmatprep.subr.mxu0 0.0
        %873 = vmatpush1.msra.mxu0 0.0
        %874 = vmatprep.subr.mxu0 0.0
        %875 = vmatpush1.msra.mxu0 0.0
        %876 = vmatprep.subr.mxu0 0.0
        %877 = vmatpush1.msra.mxu0 0.0
        %878 = vmatprep.subr.mxu0 0.0
        %879 = vmatpush1.msra.mxu0 0.0
        %880 = vmatprep.subr.mxu0 0.0
        %881 = vmatpush1.msra.mxu0 0.0
        %882 = vmatprep.subr.mxu0 0.0
        %883 = vmatpush1.msra.mxu0 0.0
        %884 = vmatprep.subr.mxu0 0.0
        %885 = vmatpush1.msra.mxu0 0.0
        %886 = vmatprep.subr.mxu0 0.0
        %887 = vmatpush1.msra.mxu0 0.0
        %888 = vmatprep.subr.mxu0 0.0
        %889 = vmatpush1.msra.mxu0 0.0
        %890 = vmatprep.subr.mxu0 0.0
        %891 = vmatpush1.msra.mxu0 0.0
        %892 = vmatprep.subr.mxu0 0.0
        %893 = vmatpush1.msra.mxu0 0.0
        %894 = vmatprep.subr.mxu0 0.0
        %895 = vmatpush1.msra.mxu0 0.0
        %896 = vmatprep.mubr.f32.mxu0 0.0
        %897 = vmatmul.mubr.f32.gmra.mrb[0].mxu0 %v830
        %v898 = vpop.f32.mrb[0].mxu0
        %v899 = vadd.f32 0.0, %v898
        %v900 = vpop.f32.mrb[0].mxu0
        %901 = vdwg.mxu0
        %903 = vrot.lane.b32.xlu0 %v899, 16
        %v904 = vpop.permute.xlu0 %903
        %vm906 = vcmask 195712
        %907 = vst.msk [vmem:[#allocation3] sm:$0xff] %vm906, %v904
        %908 = vrot.lane.b32.xlu0 %v392, 104
        %v909 = vpop.permute.xlu0 %908
        %910 = vrot.lane.b32.xlu0 %v392, 72
        %v911 = vpop.permute.xlu0 %910
        %v912 = vsel %vm398, %v909, 0
        %v914 = vsel %vm398, %v911, 0
        %916 = vmatprep.subr.mxu0 0.0
        %917 = vmatpush1.xpose.msra.mxu0 %v914
        %918 = vmatprep.subr.mxu0 0.0
        %919 = vmatpush1.xpose.msra.mxu0 0.0
        %920 = vmatprep.subr.mxu0 0.0
        %921 = vmatpush1.xpose.msra.mxu0 0.0
        %922 = vmatprep.subr.mxu0 0.0
        %923 = vmatpush1.xpose.msra.mxu0 0.0
        %924 = vmatprep.subr.mxu0 0.0
        %925 = vmatpush1.xpose.msra.mxu0 0.0
        %926 = vmatprep.subr.mxu0 0.0
        %927 = vmatpush1.xpose.msra.mxu0 0.0
        %928 = vmatprep.subr.mxu0 0.0
        %929 = vmatpush1.xpose.msra.mxu0 0.0
        %930 = vmatprep.subr.mxu0 0.0
        %931 = vmatpush1.xpose.msra.mxu0 0.0
        %932 = vmatprep.subr.mxu0 0.0
        %933 = vmatpush1.xpose.msra.mxu0 0.0
        %934 = vmatprep.subr.mxu0 0.0
        %935 = vmatpush1.xpose.msra.mxu0 0.0
        %936 = vmatprep.subr.mxu0 0.0
        %937 = vmatpush1.xpose.msra.mxu0 0.0
        %938 = vmatprep.subr.mxu0 0.0
        %939 = vmatpush1.xpose.msra.mxu0 0.0
        %940 = vmatprep.subr.mxu0 0.0
        %941 = vmatpush1.xpose.msra.mxu0 0.0
        %942 = vmatprep.subr.mxu0 0.0
        %943 = vmatpush1.xpose.msra.mxu0 0.0
        %944 = vmatprep.subr.mxu0 0.0
        %945 = vmatpush1.xpose.msra.mxu0 0.0
        %946 = vmatprep.subr.mxu0 0.0
        %947 = vmatpush1.xpose.msra.mxu0 0.0
        %948 = vmatprep.subr.mxu0 0.0
        %949 = vmatpush1.xpose.msra.mxu0 0.0
        %950 = vmatprep.subr.mxu0 0.0
        %951 = vmatpush1.xpose.msra.mxu0 0.0
        %952 = vmatprep.subr.mxu0 0.0
        %953 = vmatpush1.xpose.msra.mxu0 0.0
        %954 = vmatprep.subr.mxu0 0.0
        %955 = vmatpush1.xpose.msra.mxu0 0.0
        %956 = vmatprep.subr.mxu0 0.0
        %957 = vmatpush1.xpose.msra.mxu0 0.0
        %958 = vmatprep.subr.mxu0 0.0
        %959 = vmatpush1.xpose.msra.mxu0 0.0
        %960 = vmatprep.subr.mxu0 0.0
        %961 = vmatpush1.xpose.msra.mxu0 0.0
        %962 = vmatprep.subr.mxu0 0.0
        %963 = vmatpush1.xpose.msra.mxu0 0.0
        %964 = vmatprep.subr.mxu0 0.0
        %965 = vmatpush1.xpose.msra.mxu0 0.0
        %966 = vmatprep.subr.mxu0 0.0
        %967 = vmatpush1.xpose.msra.mxu0 0.0
        %968 = vmatprep.subr.mxu0 0.0
        %969 = vmatpush1.xpose.msra.mxu0 0.0
        %970 = vmatprep.subr.mxu0 0.0
        %971 = vmatpush1.xpose.msra.mxu0 0.0
        %972 = vmatprep.subr.mxu0 0.0
        %973 = vmatpush1.xpose.msra.mxu0 0.0
        %974 = vmatprep.subr.mxu0 0.0
        %975 = vmatpush1.xpose.msra.mxu0 0.0
        %976 = vmatprep.subr.mxu0 0.0
        %977 = vmatpush1.xpose.msra.mxu0 0.0
        %978 = vmatprep.subr.mxu0 0.0
        %979 = vmatpush1.xpose.msra.mxu0 0.0
        %980 = vmatprep.mubr.f32.mxu0 0.0
        %981 = vmatmul.mubr.f32.gmra.mrb[0].mxu0 %v912
        %v982 = vpop.f32.mrb[0].mxu0
        %v983 = vadd.f32 0.0, %v982
        %v984 = vpop.f32.mrb[0].mxu0
        %985 = vdwg.mxu0
        %v986 = vsel %vm398, %v983, -inf
        %987 = vmax.xlane.f32.xlu0 %v986
        %v988 = vpop.xlane.xlu0 %987
        %v989 = vsub.f32 %v983, %v988
        %v990 = vmul.f32 %v989, 1.442695
        %v991 = vpow.pop %v990
        %v992 = vsel %vm398, %v991, 0.0
        %993 = vadd.xlane.f32.xlu0 %v992
        %v994 = vpop.xlane.xlu0 %993
        %v995 = vrcp.pop %v994
        %v996 = vmul.f32 %v991, %v995
        %s997 = scalar_lea.vmem %s306, 24 [#allocation13]
        %998 = vst.msk [vmem:[%s997] sm:$0xff] %vm398, %v996
        %999 = vrot.lane.b32.xlu0 %v392, 40
        %v1000 = vpop.permute.xlu0 %999
        %v1003 = vsel %vm398, %v996, 0
        %1005 = vmatprep.subr.mxu0 0.0
        %1006 = vmatpush1.msra.mxu0 %v1000
        %1007 = vmatprep.subr.mxu0 0.0
        %1008 = vmatpush1.msra.mxu0 0.0
        %1009 = vmatprep.subr.mxu0 0.0
        %1010 = vmatpush1.msra.mxu0 0.0
        %1011 = vmatprep.subr.mxu0 0.0
        %1012 = vmatpush1.msra.mxu0 0.0
        %1013 = vmatprep.subr.mxu0 0.0
        %1014 = vmatpush1.msra.mxu0 0.0
        %1015 = vmatprep.subr.mxu0 0.0
        %1016 = vmatpush1.msra.mxu0 0.0
        %1017 = vmatprep.subr.mxu0 0.0
        %1018 = vmatpush1.msra.mxu0 0.0
        %1019 = vmatprep.subr.mxu0 0.0
        %1020 = vmatpush1.msra.mxu0 0.0
        %1021 = vmatprep.subr.mxu0 0.0
        %1022 = vmatpush1.msra.mxu0 0.0
        %1023 = vmatprep.subr.mxu0 0.0
        %1024 = vmatpush1.msra.mxu0 0.0
        %1025 = vmatprep.subr.mxu0 0.0
        %1026 = vmatpush1.msra.mxu0 0.0
        %1027 = vmatprep.subr.mxu0 0.0
        %1028 = vmatpush1.msra.mxu0 0.0
        %1029 = vmatprep.subr.mxu0 0.0
        %1030 = vmatpush1.msra.mxu0 0.0
        %1031 = vmatprep.subr.mxu0 0.0
        %1032 = vmatpush1.msra.mxu0 0.0
        %1033 = vmatprep.subr.mxu0 0.0
        %1034 = vmatpush1.msra.mxu0 0.0
        %1035 = vmatprep.subr.mxu0 0.0
        %1036 = vmatpush1.msra.mxu0 0.0
        %1037 = vmatprep.subr.mxu0 0.0
        %1038 = vmatpush1.msra.mxu0 0.0
        %1039 = vmatprep.subr.mxu0 0.0
        %1040 = vmatpush1.msra.mxu0 0.0
        %1041 = vmatprep.subr.mxu0 0.0
        %1042 = vmatpush1.msra.mxu0 0.0
        %1043 = vmatprep.subr.mxu0 0.0
        %1044 = vmatpush1.msra.mxu0 0.0
        %1045 = vmatprep.subr.mxu0 0.0
        %1046 = vmatpush1.msra.mxu0 0.0
        %1047 = vmatprep.subr.mxu0 0.0
        %1048 = vmatpush1.msra.mxu0 0.0
        %1049 = vmatprep.subr.mxu0 0.0
        %1050 = vmatpush1.msra.mxu0 0.0
        %1051 = vmatprep.subr.mxu0 0.0
        %1052 = vmatpush1.msra.mxu0 0.0
        %1053 = vmatprep.subr.mxu0 0.0
        %1054 = vmatpush1.msra.mxu0 0.0
        %1055 = vmatprep.subr.mxu0 0.0
        %1056 = vmatpush1.msra.mxu0 0.0
        %1057 = vmatprep.subr.mxu0 0.0
        %1058 = vmatpush1.msra.mxu0 0.0
        %1059 = vmatprep.subr.mxu0 0.0
        %1060 = vmatpush1.msra.mxu0 0.0
        %1061 = vmatprep.subr.mxu0 0.0
        %1062 = vmatpush1.msra.mxu0 0.0
        %1063 = vmatprep.subr.mxu0 0.0
        %1064 = vmatpush1.msra.mxu0 0.0
        %1065 = vmatprep.subr.mxu0 0.0
        %1066 = vmatpush1.msra.mxu0 0.0
        %1067 = vmatprep.subr.mxu0 0.0
        %1068 = vmatpush1.msra.mxu0 0.0
        %1069 = vmatprep.mubr.f32.mxu0 0.0
        %1070 = vmatmul.mubr.f32.gmra.mrb[0].mxu0 %v1003
        %v1071 = vpop.f32.mrb[0].mxu0
        %v1072 = vadd.f32 0.0, %v1071
        %v1073 = vpop.f32.mrb[0].mxu0
        %1074 = vdwg.mxu0
        %1076 = vrot.lane.b32.xlu0 %v1072, 24
        %v1077 = vpop.permute.xlu0 %1076
        %vm1079 = vcmask 261312
        %1080 = vst.msk [vmem:[#allocation3] sm:$0xff] %vm1079, %v1077
        %v1081 = vld [vmem:[#allocation2] sm:$0xff]
        %v1082 = vld [vmem:[#allocation3] sm:$0xff]
        %s1083 = scalar_lea.vmem [#allocation9], %s315
        %v1084 = vld [vmem:[%s1083] sm:$0xff]
        %v1085 = vld [vmem:[%s1083 + $0x8] sm:$0xff]
        %v1086 = vld [vmem:[%s1083 + $0x10] sm:$0xff]
        %v1087 = vld [vmem:[%s1083 + $0x18] sm:$0xff]
        %v1089 = vsel %vm321, %v1082, 0
        %1091 = vmatprep.subr.mxu0 0.0
        %1092 = vmatpush1.msra.mxu0 %v1084
        %1093 = vmatprep.subr.mxu0 0.0
        %1094 = vmatpush1.msra.mxu0 %v1085
        %1095 = vmatprep.subr.mxu0 0.0
        %1096 = vmatpush1.msra.mxu0 %v1086
        %1097 = vmatprep.subr.mxu0 0.0
        %1098 = vmatpush1.msra.mxu0 %v1087
        %1099 = vmatprep.subr.mxu0 0.0
        %1100 = vmatpush1.msra.mxu0 0.0
        %1101 = vmatprep.subr.mxu0 0.0
        %1102 = vmatpush1.msra.mxu0 0.0
        %1103 = vmatprep.subr.mxu0 0.0
        %1104 = vmatpush1.msra.mxu0 0.0
        %1105 = vmatprep.subr.mxu0 0.0
        %1106 = vmatpush1.msra.mxu0 0.0
        %1107 = vmatprep.subr.mxu0 0.0
        %1108 = vmatpush1.msra.mxu0 0.0
        %1109 = vmatprep.subr.mxu0 0.0
        %1110 = vmatpush1.msra.mxu0 0.0
        %1111 = vmatprep.subr.mxu0 0.0
        %1112 = vmatpush1.msra.mxu0 0.0
        %1113 = vmatprep.subr.mxu0 0.0
        %1114 = vmatpush1.msra.mxu0 0.0
        %1115 = vmatprep.subr.mxu0 0.0
        %1116 = vmatpush1.msra.mxu0 0.0
        %1117 = vmatprep.subr.mxu0 0.0
        %1118 = vmatpush1.msra.mxu0 0.0
        %1119 = vmatprep.subr.mxu0 0.0
        %1120 = vmatpush1.msra.mxu0 0.0
        %1121 = vmatprep.subr.mxu0 0.0
        %1122 = vmatpush1.msra.mxu0 0.0
        %1123 = vmatprep.subr.mxu0 0.0
        %1124 = vmatpush1.msra.mxu0 0.0
        %1125 = vmatprep.subr.mxu0 0.0
        %1126 = vmatpush1.msra.mxu0 0.0
        %1127 = vmatprep.subr.mxu0 0.0
        %1128 = vmatpush1.msra.mxu0 0.0
        %1129 = vmatprep.subr.mxu0 0.0
        %1130 = vmatpush1.msra.mxu0 0.0
        %1131 = vmatprep.subr.mxu0 0.0
        %1132 = vmatpush1.msra.mxu0 0.0
        %1133 = vmatprep.subr.mxu0 0.0
        %1134 = vmatpush1.msra.mxu0 0.0
        %1135 = vmatprep.subr.mxu0 0.0
        %1136 = vmatpush1.msra.mxu0 0.0
        %1137 = vmatprep.subr.mxu0 0.0
        %1138 = vmatpush1.msra.mxu0 0.0
        %1139 = vmatprep.subr.mxu0 0.0
        %1140 = vmatpush1.msra.mxu0 0.0
        %1141 = vmatprep.subr.mxu0 0.0
        %1142 = vmatpush1.msra.mxu0 0.0
        %1143 = vmatprep.subr.mxu0 0.0
        %1144 = vmatpush1.msra.mxu0 0.0
        %1145 = vmatprep.subr.mxu0 0.0
        %1146 = vmatpush1.msra.mxu0 0.0
        %1147 = vmatprep.subr.mxu0 0.0
        %1148 = vmatpush1.msra.mxu0 0.0
        %1149 = vmatprep.subr.mxu0 0.0
        %1150 = vmatpush1.msra.mxu0 0.0
        %1151 = vmatprep.subr.mxu0 0.0
        %1152 = vmatpush1.msra.mxu0 0.0
        %1153 = vmatprep.subr.mxu0 0.0
        %1154 = vmatpush1.msra.mxu0 0.0
        %1155 = vmatprep.mubr.f32.mxu0 0.0
        %1156 = vmatmul.mubr.f32.gmra.mrb[0].mxu0 %v1089
        %v1157 = vpop.f32.mrb[0].mxu0
        %v1158 = vadd.f32 0.0, %v1157
        %v1159 = vpop.f32.mrb[0].mxu0
        %1160 = vdwg.mxu0
        %v1161 = vadd.f32 %v1081, %v1158
        %1162 = vst.msk [vmem:[#allocation2] sm:$0xff] %vm321, %v1161
        // Predicated region
        $region57: #{tpu_custom_call.1} parent=35 // pred_check
          %p1163 = pneg %p308
        $region58: #{tpu_custom_call.1} parent=35 // pred_check_branch
          %1165 = sbr.rel (%p1163) target = $region60
        $region59: #{tpu_custom_call.1} parent=35 // pred_region
          %v1166 = vld [vmem:[#allocation2] sm:$0xff]
          %v1167 = vld [vmem:[#allocation10] sm:$0x1]
          %v1169 = vlaneseq
          %v1170 = vshrl.u32 %v1169, 7
          %v1171 = vsub.s32 0, %v1170
          %v1172 = vrot.slane %v1167, %v1171
          %v1174 = vadd.f32 %v1166, %v1172
          %1175 = vst.msk [vmem:[%s299] sm:$0xff] %vm321, %v1174
        $region60: #{tpu_custom_call.1} parent=35 // pred_fallthru
          _
        %s1176 = sand.u32 %s137, 1
        %s1177 = scalar_lea.sflag [#allocation6], %s1176
        %s1178 = sand.u32 %s137, 1
        %s1179 = smul.addr %s1178, 8
        %s1180 = scalar_lea.vmem [#allocation12], %s1179
        %s1181 = sand.u32 %s165, 1
        %s1182 = scalar_lea.sflag [#allocation14], %s1181
        %s1183 = sand.u32 %s165, 1
        %s1184 = smul.addr %s1183, 32
        %s1185 = scalar_lea.vmem [#allocation13], %s1184
        // Predicated region
        $region61: #{tpu_custom_call.1} parent=35 // pred_check
          %p1186 = pneg %p147
        $region62: #{tpu_custom_call.1} parent=35 // pred_check_branch
          %1188 = sbr.rel (%p1186) target = $region64
        $region63: #{tpu_custom_call.1} parent=35 // pred_region
          %s1190 = ssub.s32 128, 128
          %1191 = vsyncadd %s1177, %s1190
          %s1192 = smul.addr %s32, 128
          %s1193 = scalar_lea.hbm %s4, %s1192
          %s1195 = sshll.u32 %s1180, 4
          %s1196 = int_to_ptr.vmem [resolvable:$true] %s1195
          %1198 = dma.vmem_to_hbm [thread:$0]  %s1196, 128, %s1193, %s1177
        $region64: #{tpu_custom_call.1} parent=35 // pred_fallthru
          _
        // Predicated region
        $region65: #{tpu_custom_call.1} parent=35 // pred_check
          %p1199 = pneg %p175
        $region66: #{tpu_custom_call.1} parent=35 // pred_check_branch
          %1201 = sbr.rel (%p1199) target = $region68
        $region67: #{tpu_custom_call.1} parent=35 // pred_region
          %s1202 = smul.u32 4, %s33
          %s1204 = ssub.s32 512, 512
          %1205 = vsyncadd %s1182, %s1204
          %s1206 = smul.addr %s32, 4
          %s1207 = sadd.s32 %s1202, %s1206
          %s1208 = smul.addr %s1207, 128
          %s1209 = scalar_lea.hbm %s5, %s1208
          %s1210 = sshll.u32 %s1185, 4
          %s1211 = int_to_ptr.vmem [resolvable:$true] %s1210
          %1216 = dma.vmem_to_hbm [thread:$0]  %s1211, 512, %s1209, %s1182, 128, 128, 8
        $region68: #{tpu_custom_call.1} parent=35 // pred_fallthru
          _
      $region36: #{tpu_custom_call.1} parent=5 // pred_fallthru
        _
      %p1217 = scmp.le.s32.totalorder 2, %s23
      // Predicated region
      $region69: #{tpu_custom_call.1} parent=5 // pred_check
        %p1218 = pneg %p1217
      $region70: #{tpu_custom_call.1} parent=5 // pred_check_branch
        %1220 = sbr.rel (%p1218) target = $region72
      $region71: #{tpu_custom_call.1} parent=5 // pred_region
        %s1221 = ssub.s32 %s23, 2
        // Predicated region
        $region73: #{tpu_custom_call.1} parent=71 // pred_check
          %p1222 = pneg %p153
        $region74: #{tpu_custom_call.1} parent=71 // pred_check_branch
          %1224 = sbr.rel (%p1222) target = $region76
        $region75: #{tpu_custom_call.1} parent=71 // pred_region
          %s1225 = sand.u32 %s138, 1
          %s1226 = scalar_lea.sflag [#allocation6], %s1225
          %s1227 = sand.u32 %s138, 1
          %s1228 = smul.addr %s1227, 8
          %s1229 = scalar_lea.vmem [#allocation12], %s1228
          %1230 = dma.done %s1226, 128
        $region76: #{tpu_custom_call.1} parent=71 // pred_fallthru
          _
        // Predicated region
        $region77: #{tpu_custom_call.1} parent=71 // pred_check
          %p1231 = pneg %p181
        $region78: #{tpu_custom_call.1} parent=71 // pred_check_branch
          %1233 = sbr.rel (%p1231) target = $region80
        $region79: #{tpu_custom_call.1} parent=71 // pred_region
          %s1234 = sand.u32 %s166, 1
          %s1235 = scalar_lea.sflag [#allocation14], %s1234
          %s1236 = sand.u32 %s166, 1
          %s1237 = smul.addr %s1236, 32
          %s1238 = scalar_lea.vmem [#allocation13], %s1237
          %1239 = dma.done %s1235, 512
        $region80: #{tpu_custom_call.1} parent=71 // pred_fallthru
          _
      $region72: #{tpu_custom_call.1} parent=5 // pred_fallthru
        _
    $region6: #{tpu_custom_call.1} parent=1 // loop_footer
      %s27 = sadd.s32 1, %s23
    $region7: #{tpu_custom_call.1} parent=1 // loop_footer_branch
      %22 = sbr.rel target = $region3
    $region8: #{tpu_custom_call.1} parent=1 // loop_exit
      _
    %1240 = vsyncpa [#allocation5], 1
    %s1241 = scalar_lea.sflag [#allocation5], 1
    %1242 = vsyncpa %s1241, 1
    %1243 = vsyncpa [#allocation8], 1
    %1244 = vsyncpa [#allocation11], 1
    %1245 = vsyncpa [#allocation6], 1
    %s1246 = scalar_lea.sflag [#allocation6], 1
    %1247 = vsyncpa %s1246, 1
    %1248 = vsyncpa [#allocation14], 1
    %s1249 = scalar_lea.sflag [#allocation14], 1
    %1250 = vsyncpa %s1249, 1

</llo_original>
